<compile_context>
chip_gen: v5e
topology: v5e:2x2
jax: 0.10.0
libtpu: 0.0.40
codegen_flags: <defaults>
</compile_context>

<pallas_src>
import functools

import jax
import jax.numpy as jnp
import numpy as np
from jax.experimental import pallas as pl
from jax.experimental.pallas import tpu as pltpu

NEG_INF = float(-2 ** 32 + 1)            # same masking constant as the PyTorch module

# network sizes fixed by the module spec
ATT_H1, ATT_H2 = 80, 40                  # attention MLP hidden sizes
MLP_H1, MLP_H2, N_OUT = 200, 80, 2       # main MLP hidden sizes / logits

# packed bias/PReLU layout: 128-aligned start offsets inside one (1, 1280) row
_B_AB1, _B_AB2, _B_AB3 = 0, 128, 256
_B_MB1, _B_MB2, _B_MB3 = 384, 640, 768
_B_PA1, _B_PA2 = 896, 1152
_BIAS_W = 1280


def _mm(a, b, dtype):
    return jnp.dot(a.astype(dtype), b.astype(dtype),
                   preferred_element_type=jnp.float32)


# ----------------------------------------------------------------------------
# Pallas kernel: attention MLP + masked softmax + weighted sums + 3-layer MLP
# ----------------------------------------------------------------------------
def din_kernel(good_ref, cat_ref, user_ref, ghis_ref, chis_ref, mask_ref,
               aq_ref, au_ref, ap_ref, aw2_ref, aw3_ref,
               mw1_ref, mw2_ref, mw3_ref, bias_ref,
               out_ref, *, mxu_dtype, act_dtype):
    TB, L, D = ghis_ref.shape
    mm = functools.partial(_mm, dtype=mxu_dtype)

    qg = good_ref[...]                              # (TB, D)  query good embedding
    qc = cat_ref[...]                               # (TB, D)  query category embedding
    gh = ghis_ref[...].astype(jnp.float32)          # (TB, L, D) history good embeddings
    ch = chis_ref[...].astype(jnp.float32)          # (TB, L, D) history cat  embeddings
    mask = mask_ref[...]                            # (TB, L)

    # packed biases / PReLU slopes (static, 128-aligned lane slices)
    ab1 = bias_ref[:, _B_AB1:_B_AB1 + ATT_H1]
    ab2 = bias_ref[:, _B_AB2:_B_AB2 + ATT_H2]
    ab3 = bias_ref[:, _B_AB3:_B_AB3 + 1]
    mb1 = bias_ref[:, _B_MB1:_B_MB1 + MLP_H1]
    mb2 = bias_ref[:, _B_MB2:_B_MB2 + MLP_H2]
    mb3 = bias_ref[:, _B_MB3:_B_MB3 + N_OUT]
    pa1 = bias_ref[:, _B_PA1:_B_PA1 + MLP_H1]
    pa2 = bias_ref[:, _B_PA2:_B_PA2 + MLP_H2]

    # ---- attention fc1 with host-folded weights ------------------------------
    #   sigmoid( q@(Wq+Wd) + ub@(Wu-Wd) + (q*ub)@Wp + b1 )
    # The q-term is L-invariant -> one small matmul per batch row; the ub and
    # q*ub terms are per-(b, l) matmuls taken straight off the pipelined history
    # tiles (no feature-block assembly stores at all).
    pg = qg[:, None, :] * gh                        # (TB, L, D)
    pc = qc[:, None, :] * ch
    gh_f = gh.reshape(TB * L, D)
    ch_f = ch.reshape(TB * L, D)
    pg_f = pg.reshape(TB * L, D)
    pc_f = pc.reshape(TB * L, D)

    qcon = mm(qg, aq_ref[0:D, :]) + mm(qc, aq_ref[D:2 * D, :])         # (TB, 80)
    h1p = (mm(gh_f, au_ref[0:D, :]) + mm(ch_f, au_ref[D:2 * D, :]) +
           mm(pg_f, ap_ref[0:D, :]) + mm(pc_f, ap_ref[D:2 * D, :]))    # (TB*L, 80)
    h1p = h1p.reshape(TB, L, ATT_H1) + qcon[:, None, :] + ab1
    h1 = jax.nn.sigmoid(h1p.astype(act_dtype))                         # (TB, L, 80)

    # ---- attention fc2, then fc3 as a lane reduction -> lane-major (TB, L) ---
    h2p = mm(h1.reshape(TB * L, ATT_H1), aw2_ref[...]) + ab2
    h2 = jax.nn.sigmoid(h2p.astype(act_dtype)).astype(jnp.float32)     # (TB*L, 40)
    scores = jnp.sum(h2.reshape(TB, L, ATT_H2) * aw3_ref[...][None, :, :],
                     axis=-1) + ab3                                    # (TB, L)

    # ---- masked softmax over L (kept in f32; lane reductions, EUP recip) -----
    scores = jnp.where(mask > 0.0, scores, NEG_INF)
    m = jnp.max(scores, axis=-1, keepdims=True)
    e = jnp.exp(scores - m)
    p = e * pl.reciprocal(jnp.sum(e, axis=-1, keepdims=True), approx=True)

    # ---- attention-weighted behavior sum and plain behavior sum --------------
    pB = p[:, :, None]                              # (TB, L, 1)
    attn_g = jnp.sum(pB * gh, axis=1)               # (TB, D)
    attn_c = jnp.sum(pB * ch, axis=1)
    ubs_g = jnp.sum(gh, axis=1)
    ubs_c = jnp.sum(ch, axis=1)

    # ---- main MLP fc1 as partial row-block matmuls (no (TB, 9D) scratch) -----
    x = (mm(user_ref[...], mw1_ref[0 * D:1 * D, :]) +
         mm(qg,            mw1_ref[1 * D:2 * D, :]) +
         mm(qc,            mw1_ref[2 * D:3 * D, :]) +
         mm(ubs_g,         mw1_ref[3 * D:4 * D, :]) +
         mm(ubs_c,         mw1_ref[4 * D:5 * D, :]) +
         mm(ubs_g * qg,    mw1_ref[5 * D:6 * D, :]) +
         mm(ubs_c * qc,    mw1_ref[6 * D:7 * D, :]) +
         mm(attn_g,        mw1_ref[7 * D:8 * D, :]) +
         mm(attn_c,        mw1_ref[8 * D:9 * D, :]) + mb1)             # (TB, 200)
    x = jnp.where(x >= 0.0, x, pa1 * x)                                # PReLU(200)
    x = mm(x, mw2_ref[...]) + mb2                                      # (TB, 80)
    x = jnp.where(x >= 0.0, x, pa2 * x)                                # PReLU(80)
    out_ref[...] = mm(x, mw3_ref[...]) + mb3                           # (TB, 2)


# ----------------------------------------------------------------------------
# Parameter init (deterministic, PyTorch-like shapes; weights stored (in, out))
# ----------------------------------------------------------------------------
def init_params(key, num_users, num_goods, num_cats, D):
    ks = jax.random.split(key, 9)

    def linear(k, fan_in, fan_out):
        bound = 1.0 / np.sqrt(fan_in)
        kw, kb = jax.random.split(k)
        W = jax.random.uniform(kw, (fan_in, fan_out), jnp.float32, -bound, bound)
        b = jax.random.uniform(kb, (1, fan_out), jnp.float32, -bound, bound)
        return W, b

    p = {}
    p["user_emb"] = jax.random.normal(ks[0], (num_users, D), jnp.float32)
    p["good_emb"] = jax.random.normal(ks[1], (num_goods, D), jnp.float32)
    p["cat_emb"] = jax.random.normal(ks[2], (num_cats, D), jnp.float32)
    # attention: fc1 (8D->80), fc2 (80->40), fc3 (40->1)
    p["aw1"], p["ab1"] = linear(ks[3], 8 * D, ATT_H1)
    p["aw2"], p["ab2"] = linear(ks[4], ATT_H1, ATT_H2)
    p["aw3"], p["ab3"] = linear(ks[5], ATT_H2, 1)
    # main MLP: fc1 (9D->200), fc2 (200->80), fc3 (80->2), PReLU slopes = 0.25
    p["mw1"], p["mb1"] = linear(ks[6], 9 * D, MLP_H1)
    p["mw2"], p["mb2"] = linear(ks[7], MLP_H1, MLP_H2)
    p["mw3"], p["mb3"] = linear(ks[8], MLP_H2, N_OUT)
    p["pa1"] = jnp.full((1, MLP_H1), 0.25, jnp.float32)
    p["pa2"] = jnp.full((1, MLP_H2), 0.25, jnp.float32)
    return p


# ----------------------------------------------------------------------------
# Wrapper: embedding gathers (glue) + batch-gridded pallas_call
# ----------------------------------------------------------------------------
def _round_up(x, m):
    return (x + m - 1) // m * m


def _pad_rows(x, pad):
    if pad == 0:
        return x
    return jnp.pad(x, [(0, pad)] + [(0, 0)] * (x.ndim - 1))


def _pack_biases(p):
    buf = jnp.zeros((1, _BIAS_W), jnp.float32)
    for off, v in ((_B_AB1, p["ab1"]), (_B_AB2, p["ab2"]), (_B_AB3, p["ab3"]),
                   (_B_MB1, p["mb1"]), (_B_MB2, p["mb2"]), (_B_MB3, p["mb3"]),
                   (_B_PA1, p["pa1"]), (_B_PA2, p["pa2"])):
        v = v.reshape(-1)
        buf = buf.at[0, off:off + v.shape[0]].set(v)
    return buf


def din_pallas(p, uid, gid, cid, gid_his, cid_his, masks, *,
               tb=512, mxu_dtype=jnp.float32, act_dtype=jnp.float32,
               hist_dtype=jnp.float32, vmem_limit_bytes=48 * 1024 * 1024):
    """DIN forward.

    tb:         batch rows per grid step.  512 keeps the scoped VMEM budget under
                ~48 MiB (safe on v7x's 64 MiB VMEM); v5e/v6e (128 MiB VMEM) can
                push tb to 1024+ together with vmem_limit_bytes of 64-96 MiB.
    mxu_dtype:  MXU operand dtype (bf16 recommended on v6e/v7x, f32 on v5e).
    act_dtype:  attention-MLP sigmoid dtype (bf16 ~2x EUP on v6e/v7x, f32 on v5e
                and when strict parity with an f32 reference is required).
    hist_dtype: HBM streaming dtype for the history embeddings (bf16 halves the
                dominant HBM stream; most valuable on v5e).  The softmax and all
                sums/accumulations remain f32.
    """
    D = p["user_emb"].shape[1]
    B, L = masks.shape

    # --- embedding gathers (plain-JAX glue: data-dependent HBM gather) -------
    user = p["user_emb"][uid]                     # (B, D)
    good = p["good_emb"][gid]                     # (B, D)
    cat = p["cat_emb"][cid]                       # (B, D)
    ghis = p["good_emb"][gid_his].astype(hist_dtype)   # (B, L, D)
    chis = p["cat_emb"][cid_his].astype(hist_dtype)    # (B, L, D)
    maskf = masks.astype(jnp.float32)

    # --- batch tiling: multiple of 8; >=2 grid steps when possible so the
    #     ("parallel",) batch axis shards across v7x's two TensorCores ---------
    TB = min(tb, _round_up(max(B // 2, 8), 8))
    Bp = _round_up(B, TB)
    pad = Bp - B
    user, good, cat = [_pad_rows(a, pad) for a in (user, good, cat)]
    ghis, chis, maskf = [_pad_rows(a, pad) for a in (ghis, chis, maskf)]

    # --- attention fc1 weight folding (host-side, f32, exact reassociation) ---
    #   feat = [q | ub | q-ub | q*ub]  =>  q@(Wq+Wd) + ub@(Wu-Wd) + (q*ub)@Wp
    wdt = mxu_dtype
    aw1 = p["aw1"]
    Wq, Wu, Wd, Wp = (aw1[0:2 * D], aw1[2 * D:4 * D],
                      aw1[4 * D:6 * D], aw1[6 * D:8 * D])
    aq = (Wq + Wd).astype(wdt)                    # (2D, 80) L-invariant query term
    au = (Wu - Wd).astype(wdt)                    # (2D, 80) behaviour term
    ap = Wp.astype(wdt)                           # (2D, 80) query*behaviour term
    aw2 = p["aw2"].astype(wdt)                    # (80, 40)
    aw3row = p["aw3"].T.astype(jnp.float32)       # (1, 40)  used on the VPU
    mw1 = p["mw1"].astype(wdt)                    # (9D, 200) row-block-sliced in-kernel
    mw2 = p["mw2"].astype(wdt)                    # (200, 80)
    mw3 = p["mw3"].astype(wdt)                    # (80, 2)  no 128-lane output padding
    biases = _pack_biases(p)                      # (1, 1280) f32

    row2 = lambda i: (i, 0)
    row3 = lambda i: (i, 0, 0)
    full = lambda i: (0, 0)   # constant block index -> weights stay VMEM-resident

    out = pl.pallas_call(
        functools.partial(din_kernel, mxu_dtype=mxu_dtype, act_dtype=act_dtype),
        out_shape=jax.ShapeDtypeStruct((Bp, N_OUT), jnp.float32),
        grid=(Bp // TB,),
        in_specs=[
            pl.BlockSpec((TB, D), row2),          # good (query)
            pl.BlockSpec((TB, D), row2),          # cat  (query)
            pl.BlockSpec((TB, D), row2),          # user
            pl.BlockSpec((TB, L, D), row3),       # good history
            pl.BlockSpec((TB, L, D), row3),       # cat history
            pl.BlockSpec((TB, L), row2),          # masks
            pl.BlockSpec(aq.shape, full),         # weights: whole, block-resident
            pl.BlockSpec(au.shape, full),
            pl.BlockSpec(ap.shape, full),
            pl.BlockSpec(aw2.shape, full),
            pl.BlockSpec(aw3row.shape, full),
            pl.BlockSpec(mw1.shape, full),
            pl.BlockSpec(mw2.shape, full),
            pl.BlockSpec(mw3.shape, full),
            pl.BlockSpec(biases.shape, full),
        ],
        out_specs=pl.BlockSpec((TB, N_OUT), row2),
        compiler_params=pltpu.CompilerParams(
            dimension_semantics=("parallel",),
            vmem_limit_bytes=vmem_limit_bytes,
        ),
    )(good, cat, user, ghis, chis, maskf,
      aq, au, ap, aw2, aw3row, mw1, mw2, mw3, biases)

    return out[:B]


# ----------------------------------------------------------------------------
# Pure-JAX reference (mirrors the PyTorch forward exactly) for validation
# ----------------------------------------------------------------------------
def din_reference(p, uid, gid, cid, gid_his, cid_his, masks):
    user = p["user_emb"][uid]
    good = p["good_emb"][gid]
    cat = p["cat_emb"][cid]
    ghis = p["good_emb"][gid_his]
    chis = p["cat_emb"][cid_his]
    q = jnp.concatenate([good, cat], -1)
    ub = jnp.concatenate([ghis, chis], -1)
    B, L, D2 = ub.shape

    qe = jnp.broadcast_to(q[:, None, :], (B, L, D2))
    feat = jnp.concatenate([qe, ub, qe - ub, qe * ub], -1).reshape(B * L, -1)
    h = jax.nn.sigmoid(feat @ p["aw1"] + p["ab1"])
    h = jax.nn.sigmoid(h @ p["aw2"] + p["ab2"])
    s = (h @ p["aw3"] + p["ab3"]).reshape(B, L, 1)
    s = jnp.where(masks[:, :, None] > 0, s, NEG_INF)
    s = jax.nn.softmax(s, axis=1)
    attn = (s * ub).sum(1)
    ub_sum = ub.sum(1)

    x = jnp.concatenate([user, q, ub_sum, ub_sum * q, attn], -1)
    x = x @ p["mw1"] + p["mb1"]
    x = jnp.where(x >= 0, x, p["pa1"] * x)
    x = x @ p["mw2"] + p["mb2"]
    x = jnp.where(x >= 0, x, p["pa2"] * x)
    return x @ p["mw3"] + p["mb3"]


if __name__ == "__main__":
    key = jax.random.PRNGKey(0)
    B, L, D = 4, 8, 16                       # small shapes (embedding_dim=16)
    num_users, num_goods, num_cats = 64, 128, 32

    pkey, dkey = jax.random.split(key)
    params = init_params(pkey, num_users, num_goods, num_cats, D)

    ks = jax.random.split(dkey, 5)
    uid = jax.random.randint(ks[0], (B,), 0, num_users)
    gid = jax.random.randint(ks[1], (B,), 0, num_goods)
    cid = jax.random.randint(ks[2], (B,), 0, num_cats)
    gid_his = jax.random.randint(ks[3], (B, L), 0, num_goods)
    cid_his = jax.random.randint(ks[4], (B, L), 0, num_cats)
    # includes a fully-masked row (length 0) to exercise the -2^32+1 convention
    lengths = jnp.array([8, 5, 3, 0])
    masks = (jnp.arange(L)[None, :] < lengths[:, None]).astype(jnp.float32)

    ref = din_reference(params, uid, gid, cid, gid_his, cid_his, masks)

    # default f32 path: strict check against the f32 reference
    out = din_pallas(params, uid, gid, cid, gid_his, cid_his, masks)
    out = jax.block_until_ready(out)
    np.testing.assert_allclose(np.asarray(out), np.asarray(ref),
                               rtol=5e-3, atol=5e-3)

    # bf16 MXU / activation / history-stream path (recommended on v6e/v7x; the
    # softmax stays f32).  Only sanity-checked: bf16 is not bit-comparable to f32.
    out_bf16 = din_pallas(params, uid, gid, cid, gid_his, cid_his, masks,
                          mxu_dtype=jnp.bfloat16, act_dtype=jnp.bfloat16,
                          hist_dtype=jnp.bfloat16)
    out_bf16 = jax.block_until_ready(out_bf16)
    assert np.all(np.isfinite(np.asarray(out_bf16)))

    print("KERNEL_OK")
</pallas_src>

<mosaic_0001>
module attributes {stable_mosaic.version = 11 : i64} {
  func.func @din_kernel(%arg0: i32, %arg1: memref<8x16xf32, #tpu.memory_space<vmem>>, %arg2: memref<8x16xf32, #tpu.memory_space<vmem>>, %arg3: memref<8x16xf32, #tpu.memory_space<vmem>>, %arg4: memref<8x8x16xf32, #tpu.memory_space<vmem>>, %arg5: memref<8x8x16xf32, #tpu.memory_space<vmem>>, %arg6: memref<8x8xf32, #tpu.memory_space<vmem>>, %arg7: memref<32x80xf32, #tpu.memory_space<vmem>>, %arg8: memref<32x80xf32, #tpu.memory_space<vmem>>, %arg9: memref<32x80xf32, #tpu.memory_space<vmem>>, %arg10: memref<80x40xf32, #tpu.memory_space<vmem>>, %arg11: memref<1x40xf32, #tpu.memory_space<vmem>>, %arg12: memref<144x200xf32, #tpu.memory_space<vmem>>, %arg13: memref<200x80xf32, #tpu.memory_space<vmem>>, %arg14: memref<80x2xf32, #tpu.memory_space<vmem>>, %arg15: memref<1x1280xf32, #tpu.memory_space<vmem>>, %arg16: memref<8x2xf32, #tpu.memory_space<vmem>>) attributes {dimension_semantics = [#tpu.dimension_semantics<parallel>], iteration_bounds = array<i64: 1>, scalar_prefetch = 0 : i64, scratch_operands = 0 : i64, tpu.core_type = #tpu.core_type<tc>, window_params = [{transform_indices = @transform_0, window_bounds = array<i64: 8, 16>}, {transform_indices = @transform_1, window_bounds = array<i64: 8, 16>}, {transform_indices = @transform_2, window_bounds = array<i64: 8, 16>}, {transform_indices = @transform_3, window_bounds = array<i64: 8, 8, 16>}, {transform_indices = @transform_4, window_bounds = array<i64: 8, 8, 16>}, {transform_indices = @transform_5, window_bounds = array<i64: 8, 8>}, {pipeline_mode = #tpu.pipeline_mode<synchronous>, transform_indices = @transform_6, window_bounds = array<i64: 32, 80>}, {pipeline_mode = #tpu.pipeline_mode<synchronous>, transform_indices = @transform_7, window_bounds = array<i64: 32, 80>}, {pipeline_mode = #tpu.pipeline_mode<synchronous>, transform_indices = @transform_8, window_bounds = array<i64: 32, 80>}, {pipeline_mode = #tpu.pipeline_mode<synchronous>, transform_indices = @transform_9, window_bounds = array<i64: 80, 40>}, {pipeline_mode = #tpu.pipeline_mode<synchronous>, transform_indices = @transform_10, window_bounds = array<i64: 1, 40>}, {pipeline_mode = #tpu.pipeline_mode<synchronous>, transform_indices = @transform_11, window_bounds = array<i64: 144, 200>}, {pipeline_mode = #tpu.pipeline_mode<synchronous>, transform_indices = @transform_12, window_bounds = array<i64: 200, 80>}, {pipeline_mode = #tpu.pipeline_mode<synchronous>, transform_indices = @transform_13, window_bounds = array<i64: 80, 2>}, {pipeline_mode = #tpu.pipeline_mode<synchronous>, transform_indices = @transform_14, window_bounds = array<i64: 1, 1280>}, {transform_indices = @transform_15, window_bounds = array<i64: 8, 2>}]} {
    %c0 = arith.constant 0 : index
    %c0_0 = arith.constant 0 : index
    %0 = vector.load %arg1[%c0, %c0_0] : memref<8x16xf32, #tpu.memory_space<vmem>>, vector<8x16xf32>
    %c0_1 = arith.constant 0 : index
    %c0_2 = arith.constant 0 : index
    %1 = vector.load %arg2[%c0_1, %c0_2] : memref<8x16xf32, #tpu.memory_space<vmem>>, vector<8x16xf32>
    %c0_3 = arith.constant 0 : index
    %c0_4 = arith.constant 0 : index
    %c0_5 = arith.constant 0 : index
    %2 = vector.load %arg4[%c0_3, %c0_4, %c0_5] : memref<8x8x16xf32, #tpu.memory_space<vmem>>, vector<8x8x16xf32>
    %c0_6 = arith.constant 0 : index
    %c0_7 = arith.constant 0 : index
    %c0_8 = arith.constant 0 : index
    %3 = vector.load %arg5[%c0_6, %c0_7, %c0_8] : memref<8x8x16xf32, #tpu.memory_space<vmem>>, vector<8x8x16xf32>
    %c0_9 = arith.constant 0 : index
    %c0_10 = arith.constant 0 : index
    %4 = vector.load %arg6[%c0_9, %c0_10] : memref<8x8xf32, #tpu.memory_space<vmem>>, vector<8x8xf32>
    %c0_11 = arith.constant 0 : index
    %c0_12 = arith.constant 0 : index
    %5 = vector.load %arg15[%c0_11, %c0_12] : memref<1x1280xf32, #tpu.memory_space<vmem>>, vector<1x80xf32>
    %c0_13 = arith.constant 0 : index
    %c128 = arith.constant 128 : index
    %6 = vector.load %arg15[%c0_13, %c128] : memref<1x1280xf32, #tpu.memory_space<vmem>>, vector<1x40xf32>
    %c0_14 = arith.constant 0 : index
    %c256 = arith.constant 256 : index
    %7 = vector.load %arg15[%c0_14, %c256] : memref<1x1280xf32, #tpu.memory_space<vmem>>, vector<1x1xf32>
    %c0_15 = arith.constant 0 : index
    %c384 = arith.constant 384 : index
    %8 = vector.load %arg15[%c0_15, %c384] : memref<1x1280xf32, #tpu.memory_space<vmem>>, vector<1x200xf32>
    %c0_16 = arith.constant 0 : index
    %c640 = arith.constant 640 : index
    %9 = vector.load %arg15[%c0_16, %c640] : memref<1x1280xf32, #tpu.memory_space<vmem>>, vector<1x80xf32>
    %c0_17 = arith.constant 0 : index
    %c768 = arith.constant 768 : index
    %10 = vector.load %arg15[%c0_17, %c768] : memref<1x1280xf32, #tpu.memory_space<vmem>>, vector<1x2xf32>
    %c0_18 = arith.constant 0 : index
    %c896 = arith.constant 896 : index
    %11 = vector.load %arg15[%c0_18, %c896] : memref<1x1280xf32, #tpu.memory_space<vmem>>, vector<1x200xf32>
    %c0_19 = arith.constant 0 : index
    %c1152 = arith.constant 1152 : index
    %12 = vector.load %arg15[%c0_19, %c1152] : memref<1x1280xf32, #tpu.memory_space<vmem>>, vector<1x80xf32>
    %13 = vector.shape_cast %0 : vector<8x16xf32> to vector<8x1x16xf32>
    %14 = vector.broadcast %13 : vector<8x1x16xf32> to vector<8x8x16xf32>
    %15 = arith.mulf %14, %2 : vector<8x8x16xf32>
    %16 = vector.shape_cast %1 : vector<8x16xf32> to vector<8x1x16xf32>
    %17 = vector.broadcast %16 : vector<8x1x16xf32> to vector<8x8x16xf32>
    %18 = arith.mulf %17, %3 : vector<8x8x16xf32>
    %19 = vector.shape_cast %2 : vector<8x8x16xf32> to vector<64x16xf32>
    %20 = vector.shape_cast %3 : vector<8x8x16xf32> to vector<64x16xf32>
    %21 = vector.shape_cast %15 : vector<8x8x16xf32> to vector<64x16xf32>
    %22 = vector.shape_cast %18 : vector<8x8x16xf32> to vector<64x16xf32>
    %c0_20 = arith.constant 0 : index
    %c0_21 = arith.constant 0 : index
    %23 = vector.load %arg7[%c0_20, %c0_21] : memref<32x80xf32, #tpu.memory_space<vmem>>, vector<16x80xf32>
    %cst = arith.constant dense<0.000000e+00> : vector<8x80xf32>
    %24 = tpu.matmul %0, %23, %cst {dimension_numbers = #tpu.dot_dimension_numbers<[1], [0], [0], [1], [0, 0, 1, 1], [], []>} : vector<8x16xf32>, vector<16x80xf32>, vector<8x80xf32> -> vector<8x80xf32>
    %c16 = arith.constant 16 : index
    %c0_22 = arith.constant 0 : index
    %25 = vector.load %arg7[%c16, %c0_22] : memref<32x80xf32, #tpu.memory_space<vmem>>, vector<16x80xf32>
    %cst_23 = arith.constant dense<0.000000e+00> : vector<8x80xf32>
    %26 = tpu.matmul %1, %25, %cst_23 {dimension_numbers = #tpu.dot_dimension_numbers<[1], [0], [0], [1], [0, 0, 1, 1], [], []>} : vector<8x16xf32>, vector<16x80xf32>, vector<8x80xf32> -> vector<8x80xf32>
    %27 = arith.addf %24, %26 : vector<8x80xf32>
    %c0_24 = arith.constant 0 : index
    %c0_25 = arith.constant 0 : index
    %28 = vector.load %arg8[%c0_24, %c0_25] : memref<32x80xf32, #tpu.memory_space<vmem>>, vector<16x80xf32>
    %cst_26 = arith.constant dense<0.000000e+00> : vector<64x80xf32>
    %29 = tpu.matmul %19, %28, %cst_26 {dimension_numbers = #tpu.dot_dimension_numbers<[1], [0], [0], [1], [0, 0, 1, 1], [], []>} : vector<64x16xf32>, vector<16x80xf32>, vector<64x80xf32> -> vector<64x80xf32>
    %c16_27 = arith.constant 16 : index
    %c0_28 = arith.constant 0 : index
    %30 = vector.load %arg8[%c16_27, %c0_28] : memref<32x80xf32, #tpu.memory_space<vmem>>, vector<16x80xf32>
    %cst_29 = arith.constant dense<0.000000e+00> : vector<64x80xf32>
    %31 = tpu.matmul %20, %30, %cst_29 {dimension_numbers = #tpu.dot_dimension_numbers<[1], [0], [0], [1], [0, 0, 1, 1], [], []>} : vector<64x16xf32>, vector<16x80xf32>, vector<64x80xf32> -> vector<64x80xf32>
    %32 = arith.addf %29, %31 : vector<64x80xf32>
    %c0_30 = arith.constant 0 : index
    %c0_31 = arith.constant 0 : index
    %33 = vector.load %arg9[%c0_30, %c0_31] : memref<32x80xf32, #tpu.memory_space<vmem>>, vector<16x80xf32>
    %cst_32 = arith.constant dense<0.000000e+00> : vector<64x80xf32>
    %34 = tpu.matmul %21, %33, %cst_32 {dimension_numbers = #tpu.dot_dimension_numbers<[1], [0], [0], [1], [0, 0, 1, 1], [], []>} : vector<64x16xf32>, vector<16x80xf32>, vector<64x80xf32> -> vector<64x80xf32>
    %35 = arith.addf %32, %34 : vector<64x80xf32>
    %c16_33 = arith.constant 16 : index
    %c0_34 = arith.constant 0 : index
    %36 = vector.load %arg9[%c16_33, %c0_34] : memref<32x80xf32, #tpu.memory_space<vmem>>, vector<16x80xf32>
    %cst_35 = arith.constant dense<0.000000e+00> : vector<64x80xf32>
    %37 = tpu.matmul %22, %36, %cst_35 {dimension_numbers = #tpu.dot_dimension_numbers<[1], [0], [0], [1], [0, 0, 1, 1], [], []>} : vector<64x16xf32>, vector<16x80xf32>, vector<64x80xf32> -> vector<64x80xf32>
    %38 = arith.addf %35, %37 : vector<64x80xf32>
    %39 = vector.shape_cast %38 : vector<64x80xf32> to vector<8x8x80xf32>
    %40 = vector.shape_cast %27 : vector<8x80xf32> to vector<8x1x80xf32>
    %41 = vector.broadcast %40 : vector<8x1x80xf32> to vector<8x8x80xf32>
    %42 = arith.addf %39, %41 : vector<8x8x80xf32>
    %43 = vector.shape_cast %5 : vector<1x80xf32> to vector<1x1x80xf32>
    %44 = vector.broadcast %43 : vector<1x1x80xf32> to vector<8x8x80xf32>
    %45 = arith.addf %42, %44 : vector<8x8x80xf32>
    %46 = arith.negf %45 : vector<8x8x80xf32>
    %47 = math.exp %46 : vector<8x8x80xf32>
    %cst_36 = arith.constant 1.000000e+00 : f32
    %48 = vector.broadcast %cst_36 : f32 to vector<8x8x80xf32>
    %49 = arith.addf %48, %47 : vector<8x8x80xf32>
    %50 = arith.divf %48, %49 : vector<8x8x80xf32>
    %51 = vector.shape_cast %50 : vector<8x8x80xf32> to vector<64x80xf32>
    %c0_37 = arith.constant 0 : index
    %c0_38 = arith.constant 0 : index
    %52 = vector.load %arg10[%c0_37, %c0_38] : memref<80x40xf32, #tpu.memory_space<vmem>>, vector<80x40xf32>
    %cst_39 = arith.constant dense<0.000000e+00> : vector<64x40xf32>
    %53 = tpu.matmul %51, %52, %cst_39 {dimension_numbers = #tpu.dot_dimension_numbers<[1], [0], [0], [1], [0, 0, 1, 1], [], []>} : vector<64x80xf32>, vector<80x40xf32>, vector<64x40xf32> -> vector<64x40xf32>
    %54 = vector.broadcast %6 : vector<1x40xf32> to vector<64x40xf32>
    %55 = arith.addf %53, %54 : vector<64x40xf32>
    %56 = arith.negf %55 : vector<64x40xf32>
    %57 = math.exp %56 : vector<64x40xf32>
    %cst_40 = arith.constant 1.000000e+00 : f32
    %58 = vector.broadcast %cst_40 : f32 to vector<64x40xf32>
    %59 = arith.addf %58, %57 : vector<64x40xf32>
    %60 = arith.divf %58, %59 : vector<64x40xf32>
    %61 = vector.shape_cast %60 : vector<64x40xf32> to vector<8x8x40xf32>
    %c0_41 = arith.constant 0 : index
    %c0_42 = arith.constant 0 : index
    %62 = vector.load %arg11[%c0_41, %c0_42] : memref<1x40xf32, #tpu.memory_space<vmem>>, vector<1x40xf32>
    %63 = vector.shape_cast %62 : vector<1x40xf32> to vector<1x1x40xf32>
    %64 = vector.broadcast %63 : vector<1x1x40xf32> to vector<8x8x40xf32>
    %65 = arith.mulf %61, %64 : vector<8x8x40xf32>
    %cst_43 = arith.constant dense<0.000000e+00> : vector<8x8xf32>
    %66 = vector.multi_reduction <add>, %65, %cst_43 [2] : vector<8x8x40xf32> to vector<8x8xf32>
    %67 = vector.broadcast %7 : vector<1x1xf32> to vector<8x8xf32>
    %68 = arith.addf %66, %67 : vector<8x8xf32>
    %cst_44 = arith.constant 0.000000e+00 : f32
    %69 = vector.broadcast %cst_44 : f32 to vector<8x8xf32>
    %70 = arith.cmpf ogt, %4, %69 : vector<8x8xf32>
    %cst_45 = arith.constant -4.2949673E+9 : f32
    %71 = vector.broadcast %cst_45 : f32 to vector<8x8xf32>
    %72 = arith.select %70, %68, %71 : vector<8x8xi1>, vector<8x8xf32>
    %cst_46 = arith.constant dense<0xFF800000> : vector<8xf32>
    %73 = vector.multi_reduction <maximumf>, %72, %cst_46 [1] : vector<8x8xf32> to vector<8xf32>
    %74 = vector.shape_cast %73 : vector<8xf32> to vector<8x1xf32>
    %75 = vector.broadcast %74 : vector<8x1xf32> to vector<8x8xf32>
    %76 = arith.subf %72, %75 : vector<8x8xf32>
    %77 = math.exp %76 : vector<8x8xf32>
    %cst_47 = arith.constant dense<0.000000e+00> : vector<8xf32>
    %78 = vector.multi_reduction <add>, %77, %cst_47 [1] : vector<8x8xf32> to vector<8xf32>
    %79 = vector.shape_cast %78 : vector<8xf32> to vector<8x1xf32>
    %80 = tpu.reciprocal %79 {approx = true} : vector<8x1xf32> -> vector<8x1xf32>
    %81 = vector.broadcast %80 : vector<8x1xf32> to vector<8x8xf32>
    %82 = arith.mulf %77, %81 : vector<8x8xf32>
    %83 = vector.shape_cast %82 : vector<8x8xf32> to vector<8x8x1xf32>
    %84 = vector.broadcast %83 : vector<8x8x1xf32> to vector<8x8x16xf32>
    %85 = arith.mulf %84, %2 : vector<8x8x16xf32>
    %cst_48 = arith.constant dense<0.000000e+00> : vector<8x16xf32>
    %86 = vector.multi_reduction <add>, %85, %cst_48 [1] : vector<8x8x16xf32> to vector<8x16xf32>
    %87 = vector.broadcast %83 : vector<8x8x1xf32> to vector<8x8x16xf32>
    %88 = arith.mulf %87, %3 : vector<8x8x16xf32>
    %cst_49 = arith.constant dense<0.000000e+00> : vector<8x16xf32>
    %89 = vector.multi_reduction <add>, %88, %cst_49 [1] : vector<8x8x16xf32> to vector<8x16xf32>
    %cst_50 = arith.constant dense<0.000000e+00> : vector<8x16xf32>
    %90 = vector.multi_reduction <add>, %2, %cst_50 [1] : vector<8x8x16xf32> to vector<8x16xf32>
    %cst_51 = arith.constant dense<0.000000e+00> : vector<8x16xf32>
    %91 = vector.multi_reduction <add>, %3, %cst_51 [1] : vector<8x8x16xf32> to vector<8x16xf32>
    %c0_52 = arith.constant 0 : index
    %c0_53 = arith.constant 0 : index
    %92 = vector.load %arg3[%c0_52, %c0_53] : memref<8x16xf32, #tpu.memory_space<vmem>>, vector<8x16xf32>
    %c0_54 = arith.constant 0 : index
    %c0_55 = arith.constant 0 : index
    %93 = vector.load %arg12[%c0_54, %c0_55] : memref<144x200xf32, #tpu.memory_space<vmem>>, vector<16x200xf32>
    %cst_56 = arith.constant dense<0.000000e+00> : vector<8x200xf32>
    %94 = tpu.matmul %92, %93, %cst_56 {dimension_numbers = #tpu.dot_dimension_numbers<[1], [0], [0], [1], [0, 0, 1, 1], [], []>} : vector<8x16xf32>, vector<16x200xf32>, vector<8x200xf32> -> vector<8x200xf32>
    %c16_57 = arith.constant 16 : index
    %c0_58 = arith.constant 0 : index
    %95 = vector.load %arg12[%c16_57, %c0_58] : memref<144x200xf32, #tpu.memory_space<vmem>>, vector<16x200xf32>
    %cst_59 = arith.constant dense<0.000000e+00> : vector<8x200xf32>
    %96 = tpu.matmul %0, %95, %cst_59 {dimension_numbers = #tpu.dot_dimension_numbers<[1], [0], [0], [1], [0, 0, 1, 1], [], []>} : vector<8x16xf32>, vector<16x200xf32>, vector<8x200xf32> -> vector<8x200xf32>
    %97 = arith.addf %94, %96 : vector<8x200xf32>
    %c32 = arith.constant 32 : index
    %c0_60 = arith.constant 0 : index
    %98 = vector.load %arg12[%c32, %c0_60] : memref<144x200xf32, #tpu.memory_space<vmem>>, vector<16x200xf32>
    %cst_61 = arith.constant dense<0.000000e+00> : vector<8x200xf32>
    %99 = tpu.matmul %1, %98, %cst_61 {dimension_numbers = #tpu.dot_dimension_numbers<[1], [0], [0], [1], [0, 0, 1, 1], [], []>} : vector<8x16xf32>, vector<16x200xf32>, vector<8x200xf32> -> vector<8x200xf32>
    %100 = arith.addf %97, %99 : vector<8x200xf32>
    %c48 = arith.constant 48 : index
    %c0_62 = arith.constant 0 : index
    %101 = vector.load %arg12[%c48, %c0_62] : memref<144x200xf32, #tpu.memory_space<vmem>>, vector<16x200xf32>
    %cst_63 = arith.constant dense<0.000000e+00> : vector<8x200xf32>
    %102 = tpu.matmul %90, %101, %cst_63 {dimension_numbers = #tpu.dot_dimension_numbers<[1], [0], [0], [1], [0, 0, 1, 1], [], []>} : vector<8x16xf32>, vector<16x200xf32>, vector<8x200xf32> -> vector<8x200xf32>
    %103 = arith.addf %100, %102 : vector<8x200xf32>
    %c64 = arith.constant 64 : index
    %c0_64 = arith.constant 0 : index
    %104 = vector.load %arg12[%c64, %c0_64] : memref<144x200xf32, #tpu.memory_space<vmem>>, vector<16x200xf32>
    %cst_65 = arith.constant dense<0.000000e+00> : vector<8x200xf32>
    %105 = tpu.matmul %91, %104, %cst_65 {dimension_numbers = #tpu.dot_dimension_numbers<[1], [0], [0], [1], [0, 0, 1, 1], [], []>} : vector<8x16xf32>, vector<16x200xf32>, vector<8x200xf32> -> vector<8x200xf32>
    %106 = arith.addf %103, %105 : vector<8x200xf32>
    %107 = arith.mulf %90, %0 : vector<8x16xf32>
    %c80 = arith.constant 80 : index
    %c0_66 = arith.constant 0 : index
    %108 = vector.load %arg12[%c80, %c0_66] : memref<144x200xf32, #tpu.memory_space<vmem>>, vector<16x200xf32>
    %cst_67 = arith.constant dense<0.000000e+00> : vector<8x200xf32>
    %109 = tpu.matmul %107, %108, %cst_67 {dimension_numbers = #tpu.dot_dimension_numbers<[1], [0], [0], [1], [0, 0, 1, 1], [], []>} : vector<8x16xf32>, vector<16x200xf32>, vector<8x200xf32> -> vector<8x200xf32>
    %110 = arith.addf %106, %109 : vector<8x200xf32>
    %111 = arith.mulf %91, %1 : vector<8x16xf32>
    %c96 = arith.constant 96 : index
    %c0_68 = arith.constant 0 : index
    %112 = vector.load %arg12[%c96, %c0_68] : memref<144x200xf32, #tpu.memory_space<vmem>>, vector<16x200xf32>
    %cst_69 = arith.constant dense<0.000000e+00> : vector<8x200xf32>
    %113 = tpu.matmul %111, %112, %cst_69 {dimension_numbers = #tpu.dot_dimension_numbers<[1], [0], [0], [1], [0, 0, 1, 1], [], []>} : vector<8x16xf32>, vector<16x200xf32>, vector<8x200xf32> -> vector<8x200xf32>
    %114 = arith.addf %110, %113 : vector<8x200xf32>
    %c112 = arith.constant 112 : index
    %c0_70 = arith.constant 0 : index
    %115 = vector.load %arg12[%c112, %c0_70] : memref<144x200xf32, #tpu.memory_space<vmem>>, vector<16x200xf32>
    %cst_71 = arith.constant dense<0.000000e+00> : vector<8x200xf32>
    %116 = tpu.matmul %86, %115, %cst_71 {dimension_numbers = #tpu.dot_dimension_numbers<[1], [0], [0], [1], [0, 0, 1, 1], [], []>} : vector<8x16xf32>, vector<16x200xf32>, vector<8x200xf32> -> vector<8x200xf32>
    %117 = arith.addf %114, %116 : vector<8x200xf32>
    %c128_72 = arith.constant 128 : index
    %c0_73 = arith.constant 0 : index
    %118 = vector.load %arg12[%c128_72, %c0_73] : memref<144x200xf32, #tpu.memory_space<vmem>>, vector<16x200xf32>
    %cst_74 = arith.constant dense<0.000000e+00> : vector<8x200xf32>
    %119 = tpu.matmul %89, %118, %cst_74 {dimension_numbers = #tpu.dot_dimension_numbers<[1], [0], [0], [1], [0, 0, 1, 1], [], []>} : vector<8x16xf32>, vector<16x200xf32>, vector<8x200xf32> -> vector<8x200xf32>
    %120 = arith.addf %117, %119 : vector<8x200xf32>
    %121 = vector.broadcast %8 : vector<1x200xf32> to vector<8x200xf32>
    %122 = arith.addf %120, %121 : vector<8x200xf32>
    %cst_75 = arith.constant 0.000000e+00 : f32
    %123 = vector.broadcast %cst_75 : f32 to vector<8x200xf32>
    %124 = arith.cmpf oge, %122, %123 : vector<8x200xf32>
    %125 = vector.broadcast %11 : vector<1x200xf32> to vector<8x200xf32>
    %126 = arith.mulf %125, %122 : vector<8x200xf32>
    %127 = arith.select %124, %122, %126 : vector<8x200xi1>, vector<8x200xf32>
    %c0_76 = arith.constant 0 : index
    %c0_77 = arith.constant 0 : index
    %128 = vector.load %arg13[%c0_76, %c0_77] : memref<200x80xf32, #tpu.memory_space<vmem>>, vector<200x80xf32>
    %cst_78 = arith.constant dense<0.000000e+00> : vector<8x80xf32>
    %129 = tpu.matmul %127, %128, %cst_78 {dimension_numbers = #tpu.dot_dimension_numbers<[1], [0], [0], [1], [0, 0, 1, 1], [], []>} : vector<8x200xf32>, vector<200x80xf32>, vector<8x80xf32> -> vector<8x80xf32>
    %130 = vector.broadcast %9 : vector<1x80xf32> to vector<8x80xf32>
    %131 = arith.addf %129, %130 : vector<8x80xf32>
    %cst_79 = arith.constant 0.000000e+00 : f32
    %132 = vector.broadcast %cst_79 : f32 to vector<8x80xf32>
    %133 = arith.cmpf oge, %131, %132 : vector<8x80xf32>
    %134 = vector.broadcast %12 : vector<1x80xf32> to vector<8x80xf32>
    %135 = arith.mulf %134, %131 : vector<8x80xf32>
    %136 = arith.select %133, %131, %135 : vector<8x80xi1>, vector<8x80xf32>
    %c0_80 = arith.constant 0 : index
    %c0_81 = arith.constant 0 : index
    %137 = vector.load %arg14[%c0_80, %c0_81] : memref<80x2xf32, #tpu.memory_space<vmem>>, vector<80x2xf32>
    %cst_82 = arith.constant dense<0.000000e+00> : vector<8x2xf32>
    %138 = tpu.matmul %136, %137, %cst_82 {dimension_numbers = #tpu.dot_dimension_numbers<[1], [0], [0], [1], [0, 0, 1, 1], [], []>} : vector<8x80xf32>, vector<80x2xf32>, vector<8x2xf32> -> vector<8x2xf32>
    %139 = vector.broadcast %10 : vector<1x2xf32> to vector<8x2xf32>
    %140 = arith.addf %138, %139 : vector<8x2xf32>
    %c0_83 = arith.constant 0 : index
    %c0_84 = arith.constant 0 : index
    %141 = vector.load %arg16[%c0_83, %c0_84] : memref<8x2xf32, #tpu.memory_space<vmem>>, vector<8x2xf32>
    tpu.vector_store %arg16[%c0_83, %c0_84], %140 {strides = array<i32>} : memref<8x2xf32, #tpu.memory_space<vmem>>, vector<8x2xf32>,
    return
  }
  func.func @transform_0(%arg0: i32) -> (i32, i32) {
    %c0_i32 = arith.constant 0 : i32
    %c0_i32_0 = arith.constant 0 : i32
    return %arg0, %c0_i32 : i32, i32
  }
  func.func @transform_1(%arg0: i32) -> (i32, i32) {
    %c0_i32 = arith.constant 0 : i32
    %c0_i32_0 = arith.constant 0 : i32
    return %arg0, %c0_i32 : i32, i32
  }
  func.func @transform_2(%arg0: i32) -> (i32, i32) {
    %c0_i32 = arith.constant 0 : i32
    %c0_i32_0 = arith.constant 0 : i32
    return %arg0, %c0_i32 : i32, i32
  }
  func.func @transform_3(%arg0: i32) -> (i32, i32, i32) {
    %c0_i32 = arith.constant 0 : i32
    %c0_i32_0 = arith.constant 0 : i32
    %c0_i32_1 = arith.constant 0 : i32
    return %arg0, %c0_i32, %c0_i32_0 : i32, i32, i32
  }
  func.func @transform_4(%arg0: i32) -> (i32, i32, i32) {
    %c0_i32 = arith.constant 0 : i32
    %c0_i32_0 = arith.constant 0 : i32
    %c0_i32_1 = arith.constant 0 : i32
    return %arg0, %c0_i32, %c0_i32_0 : i32, i32, i32
  }
  func.func @transform_5(%arg0: i32) -> (i32, i32) {
    %c0_i32 = arith.constant 0 : i32
    %c0_i32_0 = arith.constant 0 : i32
    return %arg0, %c0_i32 : i32, i32
  }
  func.func @transform_6(%arg0: i32) -> (i32, i32) {
    %c0_i32 = arith.constant 0 : i32
    %c0_i32_0 = arith.constant 0 : i32
    %c0_i32_1 = arith.constant 0 : i32
    return %c0_i32, %c0_i32_0 : i32, i32
  }
  func.func @transform_7(%arg0: i32) -> (i32, i32) {
    %c0_i32 = arith.constant 0 : i32
    %c0_i32_0 = arith.constant 0 : i32
    %c0_i32_1 = arith.constant 0 : i32
    return %c0_i32, %c0_i32_0 : i32, i32
  }
  func.func @transform_8(%arg0: i32) -> (i32, i32) {
    %c0_i32 = arith.constant 0 : i32
    %c0_i32_0 = arith.constant 0 : i32
    %c0_i32_1 = arith.constant 0 : i32
    return %c0_i32, %c0_i32_0 : i32, i32
  }
  func.func @transform_9(%arg0: i32) -> (i32, i32) {
    %c0_i32 = arith.constant 0 : i32
    %c0_i32_0 = arith.constant 0 : i32
    %c0_i32_1 = arith.constant 0 : i32
    return %c0_i32, %c0_i32_0 : i32, i32
  }
  func.func @transform_10(%arg0: i32) -> (i32, i32) {
    %c0_i32 = arith.constant 0 : i32
    %c0_i32_0 = arith.constant 0 : i32
    %c0_i32_1 = arith.constant 0 : i32
    return %c0_i32, %c0_i32_0 : i32, i32
  }
  func.func @transform_11(%arg0: i32) -> (i32, i32) {
    %c0_i32 = arith.constant 0 : i32
    %c0_i32_0 = arith.constant 0 : i32
    %c0_i32_1 = arith.constant 0 : i32
    return %c0_i32, %c0_i32_0 : i32, i32
  }
  func.func @transform_12(%arg0: i32) -> (i32, i32) {
    %c0_i32 = arith.constant 0 : i32
    %c0_i32_0 = arith.constant 0 : i32
    %c0_i32_1 = arith.constant 0 : i32
    return %c0_i32, %c0_i32_0 : i32, i32
  }
  func.func @transform_13(%arg0: i32) -> (i32, i32) {
    %c0_i32 = arith.constant 0 : i32
    %c0_i32_0 = arith.constant 0 : i32
    %c0_i32_1 = arith.constant 0 : i32
    return %c0_i32, %c0_i32_0 : i32, i32
  }
  func.func @transform_14(%arg0: i32) -> (i32, i32) {
    %c0_i32 = arith.constant 0 : i32
    %c0_i32_0 = arith.constant 0 : i32
    %c0_i32_1 = arith.constant 0 : i32
    return %c0_i32, %c0_i32_0 : i32, i32
  }
  func.func @transform_15(%arg0: i32) -> (i32, i32) {
    %c0_i32 = arith.constant 0 : i32
    %c0_i32_0 = arith.constant 0 : i32
    return %arg0, %c0_i32 : i32, i32
  }
}

</mosaic_0001>

<llo_original>
// kernel: tpu_custom_call.1
$region0: #{tpu_custom_call.1}
  #allocation0 [shape = 'u32[]', space=smem, size = 0x4, offset = 0x4, fixed_abs, tag = 'smem constant byte address 0x4 - core index']
  #allocation1 [shape = 'u32[72,128]{1,0:T(1,128)}', space=vmem, size = 0x9000, scoped, tag = 'internal scratch']
  %s0 = inlined_call_operand.vmem [shape: f32[8,16], index: 0, kind: input, shape index: {}]
  %s1 = inlined_call_operand.vmem [shape: f32[8,16], index: 1, kind: input, shape index: {}]
  %s2 = inlined_call_operand.hbm [shape: f32[8,16], index: 2, kind: input, shape index: {}]
  %s3 = inlined_call_operand.vmem [shape: f32[8,8,16], index: 3, kind: input, shape index: {}]
  %s4 = inlined_call_operand.hbm [shape: f32[8,8,16], index: 4, kind: input, shape index: {}]
  %s5 = inlined_call_operand.hbm [shape: f32[8,8], index: 5, kind: input, shape index: {}]
  %s6 = inlined_call_operand.vmem [shape: f32[32,80], index: 6, kind: input, shape index: {}]
  %s7 = inlined_call_operand.hbm [shape: f32[32,80], index: 7, kind: input, shape index: {}]
  %s8 = inlined_call_operand.hbm [shape: f32[32,80], index: 8, kind: input, shape index: {}]
  %s9 = inlined_call_operand.vmem [shape: f32[80,40], index: 9, kind: input, shape index: {}]
  %s10 = inlined_call_operand.vmem [shape: f32[1,40], index: 10, kind: input, shape index: {}]
  %s11 = inlined_call_operand.vmem [shape: f32[144,200], index: 11, kind: input, shape index: {}]
  %s12 = inlined_call_operand.vmem [shape: f32[200,80], index: 12, kind: input, shape index: {}]
  %s13 = inlined_call_operand.vmem [shape: f32[80,2], index: 13, kind: input, shape index: {}]
  %s14 = inlined_call_operand.vmem [shape: f32[1,1280], index: 14, kind: input, shape index: {}]
  %s15 = inlined_call_operand.vmem [shape: f32[8,2], index: 15, kind: output, shape index: {}]
  %s16 = sld [smem:[#allocation0]]
  $region90: #{tpu_custom_call.1} parent=0
    _
  %s18 = ssub.s32 1, %s16
  %s19 = scalar_select 0, %s18, %s16
  $region1: #{tpu_custom_call.1} parent=0
    #allocation2 [shape = 'u8[4096]{0}', space=vmem, size = 0x1000, scoped, tag = 'input window, operand 2, single buffered']
    #allocation3 [shape = 's32[1]{0}', space=sflag, size = 0x4, scoped, tag = 'scoped memory for tpu_custom_call.1']
    #allocation4 [shape = 'u8[32768]{0}', space=vmem, size = 0x8000, scoped, tag = 'input window, operand 4, single buffered']
    #allocation5 [shape = 's32[1]{0}', space=sflag, size = 0x4, scoped, tag = 'scoped memory for tpu_custom_call.1']
    #allocation6 [shape = 'u8[4096]{0}', space=vmem, size = 0x1000, scoped, tag = 'input window, operand 5, single buffered']
    #allocation7 [shape = 'u8[16384]{0}', space=vmem, size = 0x4000, scoped, tag = 'input window, operand 7, single buffered']
    #allocation8 [shape = 's32[1]{0}', space=sflag, size = 0x4, scoped, tag = 'scoped memory for tpu_custom_call.1']
    #allocation9 [shape = 'u8[16384]{0}', space=vmem, size = 0x4000, scoped, tag = 'input window, operand 8, single buffered']
    %20 = vsyncpa [#allocation3], 0
    %21 = vsyncpa [#allocation5], 0
    %22 = vsyncpa [#allocation8], 0
    // Predicated region
    $region2: #{tpu_custom_call.1} parent=1 // pred_check
      _
    $region3: #{tpu_custom_call.1} parent=1 // pred_check_branch
      %24 = sbr.rel (0) target = $region5
    $region4: #{tpu_custom_call.1} parent=1 // pred_region
      _
    $region5: #{tpu_custom_call.1} parent=1 // pred_fallthru
      _
    // Predicated region
    $region6: #{tpu_custom_call.1} parent=1 // pred_check
      _
    $region7: #{tpu_custom_call.1} parent=1 // pred_check_branch
      %26 = sbr.rel (0) target = $region9
    $region8: #{tpu_custom_call.1} parent=1 // pred_region
      _
    $region9: #{tpu_custom_call.1} parent=1 // pred_fallthru
      _
    // Predicated region
    $region10: #{tpu_custom_call.1} parent=1 // pred_check
      _
    $region11: #{tpu_custom_call.1} parent=1 // pred_check_branch
      %28 = sbr.rel (0) target = $region13
    $region12: #{tpu_custom_call.1} parent=1 // pred_region
      %30 = vsyncadd [#allocation3], 0
      %s32 = sshll.u32 %s2, 4
      %s33 = int_to_ptr.hbm [resolvable:$true] %s32
      %s34 = sshll.u32 [#allocation2], 4
      %s35 = int_to_ptr.vmem [resolvable:$true] %s34
      %37 = dma.hbm_to_vmem [thread:$0]  %s33, 128, %s35, [#allocation3]
    $region13: #{tpu_custom_call.1} parent=1 // pred_fallthru
      _
    // Predicated region
    $region14: #{tpu_custom_call.1} parent=1 // pred_check
      _
    $region15: #{tpu_custom_call.1} parent=1 // pred_check_branch
      %39 = sbr.rel (0) target = $region17
    $region16: #{tpu_custom_call.1} parent=1 // pred_region
      _
    $region17: #{tpu_custom_call.1} parent=1 // pred_fallthru
      _
    // Predicated region
    $region18: #{tpu_custom_call.1} parent=1 // pred_check
      _
    $region19: #{tpu_custom_call.1} parent=1 // pred_check_branch
      %41 = sbr.rel (0) target = $region21
    $region20: #{tpu_custom_call.1} parent=1 // pred_region
      %43 = vsyncadd [#allocation5], 0
      %s44 = sshll.u32 %s4, 4
      %s45 = int_to_ptr.hbm [resolvable:$true] %s44
      %s46 = sshll.u32 [#allocation4], 4
      %s47 = int_to_ptr.vmem [resolvable:$true] %s46
      %52 = dma.hbm_to_vmem [thread:$0]  %s45, 1024, %s47, [#allocation5], 128, 128, 8
    $region21: #{tpu_custom_call.1} parent=1 // pred_fallthru
      _
    // Predicated region
    $region22: #{tpu_custom_call.1} parent=1 // pred_check
      _
    $region23: #{tpu_custom_call.1} parent=1 // pred_check_branch
      %54 = sbr.rel (0) target = $region25
    $region24: #{tpu_custom_call.1} parent=1 // pred_region
      %56 = vsyncadd [#allocation5], 0
      %s58 = sshll.u32 %s5, 4
      %s59 = int_to_ptr.hbm [resolvable:$true] %s58
      %s60 = sshll.u32 [#allocation6], 4
      %s61 = int_to_ptr.vmem [resolvable:$true] %s60
      %63 = dma.hbm_to_vmem [thread:$0]  %s59, 128, %s61, [#allocation5]
    $region25: #{tpu_custom_call.1} parent=1 // pred_fallthru
      _
    // Predicated region
    $region26: #{tpu_custom_call.1} parent=1 // pred_check
      _
    $region27: #{tpu_custom_call.1} parent=1 // pred_check_branch
      %65 = sbr.rel (0) target = $region29
    $region28: #{tpu_custom_call.1} parent=1 // pred_region
      _
    $region29: #{tpu_custom_call.1} parent=1 // pred_fallthru
      _
    // Predicated region
    $region30: #{tpu_custom_call.1} parent=1 // pred_check
      _
    $region31: #{tpu_custom_call.1} parent=1 // pred_check_branch
      %67 = sbr.rel (0) target = $region33
    $region32: #{tpu_custom_call.1} parent=1 // pred_region
      %69 = vsyncadd [#allocation8], 0
      %s70 = sshll.u32 %s7, 4
      %s71 = int_to_ptr.hbm [resolvable:$true] %s70
      %s72 = sshll.u32 [#allocation7], 4
      %s73 = int_to_ptr.vmem [resolvable:$true] %s72
      %78 = dma.hbm_to_vmem [thread:$0]  %s71, 512, %s73, [#allocation8], 128, 128, 8
    $region33: #{tpu_custom_call.1} parent=1 // pred_fallthru
      _
    // Predicated region
    $region34: #{tpu_custom_call.1} parent=1 // pred_check
      _
    $region35: #{tpu_custom_call.1} parent=1 // pred_check_branch
      %80 = sbr.rel (0) target = $region37
    $region36: #{tpu_custom_call.1} parent=1 // pred_region
      %82 = vsyncadd [#allocation8], 0
      %s83 = sshll.u32 %s8, 4
      %s84 = int_to_ptr.hbm [resolvable:$true] %s83
      %s85 = sshll.u32 [#allocation9], 4
      %s86 = int_to_ptr.vmem [resolvable:$true] %s85
      %91 = dma.hbm_to_vmem [thread:$0]  %s84, 512, %s86, [#allocation8], 128, 128, 8
    $region37: #{tpu_custom_call.1} parent=1 // pred_fallthru
      _
    // Predicated region
    $region38: #{tpu_custom_call.1} parent=1 // pred_check
      _
    $region39: #{tpu_custom_call.1} parent=1 // pred_check_branch
      %93 = sbr.rel (0) target = $region41
    $region40: #{tpu_custom_call.1} parent=1 // pred_region
      _
    $region41: #{tpu_custom_call.1} parent=1 // pred_fallthru
      _
    // Predicated region
    $region42: #{tpu_custom_call.1} parent=1 // pred_check
      _
    $region43: #{tpu_custom_call.1} parent=1 // pred_check_branch
      %95 = sbr.rel (0) target = $region45
    $region44: #{tpu_custom_call.1} parent=1 // pred_region
      _
    $region45: #{tpu_custom_call.1} parent=1 // pred_fallthru
      _
    // Predicated region
    $region46: #{tpu_custom_call.1} parent=1 // pred_check
      _
    $region47: #{tpu_custom_call.1} parent=1 // pred_check_branch
      %97 = sbr.rel (0) target = $region49
    $region48: #{tpu_custom_call.1} parent=1 // pred_region
      _
    $region49: #{tpu_custom_call.1} parent=1 // pred_fallthru
      _
    // Predicated region
    $region50: #{tpu_custom_call.1} parent=1 // pred_check
      _
    $region51: #{tpu_custom_call.1} parent=1 // pred_check_branch
      %99 = sbr.rel (0) target = $region53
    $region52: #{tpu_custom_call.1} parent=1 // pred_region
      _
    $region53: #{tpu_custom_call.1} parent=1 // pred_fallthru
      _
    // Predicated region
    $region54: #{tpu_custom_call.1} parent=1 // pred_check
      _
    $region55: #{tpu_custom_call.1} parent=1 // pred_check_branch
      %101 = sbr.rel (0) target = $region57
    $region56: #{tpu_custom_call.1} parent=1 // pred_region
      _
    $region57: #{tpu_custom_call.1} parent=1 // pred_fallthru
      _
    // Predicated region
    $region58: #{tpu_custom_call.1} parent=1 // pred_check
      _
    $region59: #{tpu_custom_call.1} parent=1 // pred_check_branch
      %103 = sbr.rel (0) target = $region61
    $region60: #{tpu_custom_call.1} parent=1 // pred_region
      _
    $region61: #{tpu_custom_call.1} parent=1 // pred_fallthru
      _
    // Predicated region
    $region62: #{tpu_custom_call.1} parent=1 // pred_check
      _
    $region63: #{tpu_custom_call.1} parent=1 // pred_check_branch
      %105 = sbr.rel (0) target = $region65
    $region64: #{tpu_custom_call.1} parent=1 // pred_region
      %107 = dma.done [#allocation3], 128
    $region65: #{tpu_custom_call.1} parent=1 // pred_fallthru
      _
    // Predicated region
    $region66: #{tpu_custom_call.1} parent=1 // pred_check
      _
    $region67: #{tpu_custom_call.1} parent=1 // pred_check_branch
      %109 = sbr.rel (0) target = $region69
    $region68: #{tpu_custom_call.1} parent=1 // pred_region
      %111 = dma.done [#allocation5], 1024
    $region69: #{tpu_custom_call.1} parent=1 // pred_fallthru
      _
    // Predicated region
    $region70: #{tpu_custom_call.1} parent=1 // pred_check
      _
    $region71: #{tpu_custom_call.1} parent=1 // pred_check_branch
      %113 = sbr.rel (0) target = $region73
    $region72: #{tpu_custom_call.1} parent=1 // pred_region
      %115 = dma.done [#allocation5], 128
    $region73: #{tpu_custom_call.1} parent=1 // pred_fallthru
      _
    // Predicated region
    $region74: #{tpu_custom_call.1} parent=1 // pred_check
      _
    $region75: #{tpu_custom_call.1} parent=1 // pred_check_branch
      %117 = sbr.rel (0) target = $region77
    $region76: #{tpu_custom_call.1} parent=1 // pred_region
      %119 = dma.done [#allocation8], 512
    $region77: #{tpu_custom_call.1} parent=1 // pred_fallthru
      _
    // Predicated region
    $region78: #{tpu_custom_call.1} parent=1 // pred_check
      _
    $region79: #{tpu_custom_call.1} parent=1 // pred_check_branch
      %121 = sbr.rel (0) target = $region81
    $region80: #{tpu_custom_call.1} parent=1 // pred_region
      %123 = dma.done [#allocation8], 512
    $region81: #{tpu_custom_call.1} parent=1 // pred_fallthru
      _
    %v124 = vld [vmem:[%s0] sm:$0xff]
    %v125 = vld [vmem:[%s1] sm:$0xff]
    %v126 = vld [vmem:[%s3] sm:$0xff]
    %v127 = vld [vmem:[%s3 + $0x8] sm:$0xff]
    %v128 = vld [vmem:[%s3 + $0x10] sm:$0xff]
    %v129 = vld [vmem:[%s3 + $0x18] sm:$0xff]
    %v130 = vld [vmem:[%s3 + $0x20] sm:$0xff]
    %v131 = vld [vmem:[%s3 + $0x28] sm:$0xff]
    %v132 = vld [vmem:[%s3 + $0x30] sm:$0xff]
    %v133 = vld [vmem:[%s3 + $0x38] sm:$0xff]
    %v134 = vld [vmem:[#allocation4] sm:$0xff]
    %v135 = vld [vmem:[#allocation4 + $0x8] sm:$0xff]
    %v136 = vld [vmem:[#allocation4 + $0x10] sm:$0xff]
    %v137 = vld [vmem:[#allocation4 + $0x18] sm:$0xff]
    %v138 = vld [vmem:[#allocation4 + $0x20] sm:$0xff]
    %v139 = vld [vmem:[#allocation4 + $0x28] sm:$0xff]
    %v140 = vld [vmem:[#allocation4 + $0x30] sm:$0xff]
    %v141 = vld [vmem:[#allocation4 + $0x38] sm:$0xff]
    %v142 = vld [vmem:[#allocation6] sm:$0xff]
    %v143 = vld [vmem:[%s14] sm:$0x1]
    %v144 = vld [vmem:[%s14 + $0x1] sm:$0x1]
    %v145 = vld [vmem:[%s14 + $0x2] sm:$0x1]
    %v146 = vld [vmem:[%s14 + $0x3] sm:$0x3]
    %v147 = vld [vmem:[%s14 + $0x5] sm:$0x1]
    %v148 = vld [vmem:[%s14 + $0x6] sm:$0x1]
    %v149 = vld [vmem:[%s14 + $0x7] sm:$0x3]
    %v150 = vld [vmem:[%s14 + $0x9] sm:$0x1]
    %v152 = vrot.slane %v124, 1
    %v153 = vrot.slane %v124, 2
    %v154 = vrot.slane %v124, 3
    %v155 = vrot.slane %v124, 4
    %v156 = vrot.slane %v124, 5
    %v157 = vrot.slane %v124, 6
    %v158 = vrot.slane %v124, 7
    %v159 = vperm.slane %v124, 0
    %v160 = vperm.slane %v152, 0
    %v161 = vperm.slane %v153, 0
    %v162 = vperm.slane %v154, 0
    %v163 = vperm.slane %v155, 0
    %v164 = vperm.slane %v156, 0
    %v165 = vperm.slane %v157, 0
    %v166 = vperm.slane %v158, 0
    %v175 = vmul.f32 %v159, %v126
    %v176 = vmul.f32 %v160, %v127
    %v177 = vmul.f32 %v161, %v128
    %v178 = vmul.f32 %v162, %v129
    %v179 = vmul.f32 %v163, %v130
    %v180 = vmul.f32 %v164, %v131
    %v181 = vmul.f32 %v165, %v132
    %v182 = vmul.f32 %v166, %v133
    %v184 = vrot.slane %v125, 1
    %v185 = vrot.slane %v125, 2
    %v186 = vrot.slane %v125, 3
    %v187 = vrot.slane %v125, 4
    %v188 = vrot.slane %v125, 5
    %v189 = vrot.slane %v125, 6
    %v190 = vrot.slane %v125, 7
    %v191 = vperm.slane %v125, 0
    %v192 = vperm.slane %v184, 0
    %v193 = vperm.slane %v185, 0
    %v194 = vperm.slane %v186, 0
    %v195 = vperm.slane %v187, 0
    %v196 = vperm.slane %v188, 0
    %v197 = vperm.slane %v189, 0
    %v198 = vperm.slane %v190, 0
    %v207 = vmul.f32 %v191, %v134
    %v208 = vmul.f32 %v192, %v135
    %v209 = vmul.f32 %v193, %v136
    %v210 = vmul.f32 %v194, %v137
    %v211 = vmul.f32 %v195, %v138
    %v212 = vmul.f32 %v196, %v139
    %v213 = vmul.f32 %v197, %v140
    %v214 = vmul.f32 %v198, %v141
    %v215 = vld [vmem:[%s6] sm:$0xff]
    %v216 = vld [vmem:[%s6 + $0x8] sm:$0xff]
    %v217 = vld [vmem:[%s6 + $0x10] sm:$0xff]
    %v218 = vld [vmem:[%s6 + $0x18] sm:$0xff]
    %vm219 = vcmask 130048
    %v220 = vsel %vm219, %v125, 0
    %222 = vmatpush.msra.mxu0 0.0
    %223 = vmatpush.msra.mxu0 0.0
    %224 = vmatpush.msra.mxu0 0.0
    %225 = vmatpush.msra.mxu0 0.0
    %226 = vmatpush.msra.mxu0 0.0
    %227 = vmatpush.msra.mxu0 0.0
    %228 = vmatpush.msra.mxu0 0.0
    %229 = vmatpush.msra.mxu0 0.0
    %230 = vmatpush.msra.mxu0 0.0
    %231 = vmatpush.msra.mxu0 0.0
    %232 = vmatpush.msra.mxu0 0.0
    %233 = vmatpush.msra.mxu0 0.0
    %234 = vmatpush.msra.mxu0 0.0
    %235 = vmatpush.msra.mxu0 0.0
    %236 = vmatpush.msra.mxu0 %v218
    %237 = vmatpush.msra.mxu0 %v217
    %238 = vmatmul.f32.gmra.mxu0 %v220
    %v239 = vpop.f32.mrf.mxu0
    %v240 = vadd.f32 0.0, %v239
    %241 = vdwg.mxu0
    %v242 = vsel %vm219, %v124, 0
    %244 = vmatpush.msra.mxu0 0.0
    %245 = vmatpush.msra.mxu0 0.0
    %246 = vmatpush.msra.mxu0 0.0
    %247 = vmatpush.msra.mxu0 0.0
    %248 = vmatpush.msra.mxu0 0.0
    %249 = vmatpush.msra.mxu0 0.0
    %250 = vmatpush.msra.mxu0 0.0
    %251 = vmatpush.msra.mxu0 0.0
    %252 = vmatpush.msra.mxu0 0.0
    %253 = vmatpush.msra.mxu0 0.0
    %254 = vmatpush.msra.mxu0 0.0
    %255 = vmatpush.msra.mxu0 0.0
    %256 = vmatpush.msra.mxu0 0.0
    %257 = vmatpush.msra.mxu0 0.0
    %258 = vmatpush.msra.mxu0 %v216
    %259 = vmatpush.msra.mxu0 %v215
    %260 = vmatmul.f32.gmra.mxu0 %v242
    %v261 = vpop.f32.mrf.mxu0
    %v262 = vadd.f32 %v240, %v261
    %263 = vdwg.mxu0
    %v264 = vld [vmem:[#allocation7] sm:$0xff]
    %v265 = vld [vmem:[#allocation7 + $0x8] sm:$0xff]
    %v266 = vld [vmem:[#allocation7 + $0x10] sm:$0xff]
    %v267 = vld [vmem:[#allocation7 + $0x18] sm:$0xff]
    %v269 = vsel %vm219, %v134, 0
    %v272 = vsel %vm219, %v135, 0
    %v275 = vsel %vm219, %v136, 0
    %v278 = vsel %vm219, %v137, 0
    %v281 = vsel %vm219, %v138, 0
    %v284 = vsel %vm219, %v139, 0
    %v287 = vsel %vm219, %v140, 0
    %v290 = vsel %vm219, %v141, 0
    %292 = vmatpush.msra.mxu0 0.0
    %293 = vmatpush.msra.mxu0 0.0
    %294 = vmatpush.msra.mxu0 0.0
    %295 = vmatpush.msra.mxu0 0.0
    %296 = vmatpush.msra.mxu0 0.0
    %297 = vmatpush.msra.mxu0 0.0
    %298 = vmatpush.msra.mxu0 0.0
    %299 = vmatpush.msra.mxu0 0.0
    %300 = vmatpush.msra.mxu0 0.0
    %301 = vmatpush.msra.mxu0 0.0
    %302 = vmatpush.msra.mxu0 0.0
    %303 = vmatpush.msra.mxu0 0.0
    %304 = vmatpush.msra.mxu0 0.0
    %305 = vmatpush.msra.mxu0 0.0
    %306 = vmatpush.msra.mxu0 %v267
    %307 = vmatpush.msra.mxu0 %v266
    %308 = vmatmul.f32.gmra.mxu0 %v269
    %v309 = vpop.f32.mrf.mxu0
    %v310 = vadd.f32 0.0, %v309
    %311 = vmatmul.f32.gmra.mxu0 %v272
    %v312 = vpop.f32.mrf.mxu0
    %v313 = vadd.f32 0.0, %v312
    %314 = vmatmul.f32.gmra.mxu0 %v275
    %v315 = vpop.f32.mrf.mxu0
    %v316 = vadd.f32 0.0, %v315
    %317 = vmatmul.f32.gmra.mxu0 %v278
    %v318 = vpop.f32.mrf.mxu0
    %v319 = vadd.f32 0.0, %v318
    %320 = vmatmul.f32.gmra.mxu0 %v281
    %v321 = vpop.f32.mrf.mxu0
    %v322 = vadd.f32 0.0, %v321
    %323 = vmatmul.f32.gmra.mxu0 %v284
    %v324 = vpop.f32.mrf.mxu0
    %v325 = vadd.f32 0.0, %v324
    %326 = vmatmul.f32.gmra.mxu0 %v287
    %v327 = vpop.f32.mrf.mxu0
    %v328 = vadd.f32 0.0, %v327
    %329 = vmatmul.f32.gmra.mxu0 %v290
    %v330 = vpop.f32.mrf.mxu0
    %v331 = vadd.f32 0.0, %v330
    %332 = vdwg.mxu0
    %v334 = vsel %vm219, %v126, 0
    %v337 = vsel %vm219, %v127, 0
    %v340 = vsel %vm219, %v128, 0
    %v343 = vsel %vm219, %v129, 0
    %v346 = vsel %vm219, %v130, 0
    %v349 = vsel %vm219, %v131, 0
    %v352 = vsel %vm219, %v132, 0
    %v355 = vsel %vm219, %v133, 0
    %357 = vmatpush.msra.mxu0 0.0
    %358 = vmatpush.msra.mxu0 0.0
    %359 = vmatpush.msra.mxu0 0.0
    %360 = vmatpush.msra.mxu0 0.0
    %361 = vmatpush.msra.mxu0 0.0
    %362 = vmatpush.msra.mxu0 0.0
    %363 = vmatpush.msra.mxu0 0.0
    %364 = vmatpush.msra.mxu0 0.0
    %365 = vmatpush.msra.mxu0 0.0
    %366 = vmatpush.msra.mxu0 0.0
    %367 = vmatpush.msra.mxu0 0.0
    %368 = vmatpush.msra.mxu0 0.0
    %369 = vmatpush.msra.mxu0 0.0
    %370 = vmatpush.msra.mxu0 0.0
    %371 = vmatpush.msra.mxu0 %v265
    %372 = vmatpush.msra.mxu0 %v264
    %373 = vmatmul.f32.gmra.mxu0 %v334
    %v374 = vpop.f32.mrf.mxu0
    %v375 = vadd.f32 %v310, %v374
    %376 = vmatmul.f32.gmra.mxu0 %v337
    %v377 = vpop.f32.mrf.mxu0
    %v378 = vadd.f32 %v313, %v377
    %379 = vmatmul.f32.gmra.mxu0 %v340
    %v380 = vpop.f32.mrf.mxu0
    %v381 = vadd.f32 %v316, %v380
    %382 = vmatmul.f32.gmra.mxu0 %v343
    %v383 = vpop.f32.mrf.mxu0
    %v384 = vadd.f32 %v319, %v383
    %385 = vmatmul.f32.gmra.mxu0 %v346
    %v386 = vpop.f32.mrf.mxu0
    %v387 = vadd.f32 %v322, %v386
    %388 = vmatmul.f32.gmra.mxu0 %v349
    %v389 = vpop.f32.mrf.mxu0
    %v390 = vadd.f32 %v325, %v389
    %391 = vmatmul.f32.gmra.mxu0 %v352
    %v392 = vpop.f32.mrf.mxu0
    %v393 = vadd.f32 %v328, %v392
    %394 = vmatmul.f32.gmra.mxu0 %v355
    %v395 = vpop.f32.mrf.mxu0
    %v396 = vadd.f32 %v331, %v395
    %397 = vdwg.mxu0
    %v398 = vld [vmem:[#allocation9] sm:$0xff]
    %v399 = vld [vmem:[#allocation9 + $0x8] sm:$0xff]
    %v401 = vsel %vm219, %v175, 0
    %v404 = vsel %vm219, %v176, 0
    %v407 = vsel %vm219, %v177, 0
    %v410 = vsel %vm219, %v178, 0
    %v413 = vsel %vm219, %v179, 0
    %v416 = vsel %vm219, %v180, 0
    %v419 = vsel %vm219, %v181, 0
    %v422 = vsel %vm219, %v182, 0
    %424 = vmatpush.msra.mxu0 0.0
    %425 = vmatpush.msra.mxu0 0.0
    %426 = vmatpush.msra.mxu0 0.0
    %427 = vmatpush.msra.mxu0 0.0
    %428 = vmatpush.msra.mxu0 0.0
    %429 = vmatpush.msra.mxu0 0.0
    %430 = vmatpush.msra.mxu0 0.0
    %431 = vmatpush.msra.mxu0 0.0
    %432 = vmatpush.msra.mxu0 0.0
    %433 = vmatpush.msra.mxu0 0.0
    %434 = vmatpush.msra.mxu0 0.0
    %435 = vmatpush.msra.mxu0 0.0
    %436 = vmatpush.msra.mxu0 0.0
    %437 = vmatpush.msra.mxu0 0.0
    %438 = vmatpush.msra.mxu0 %v399
    %439 = vmatpush.msra.mxu0 %v398
    %440 = vmatmul.f32.gmra.mxu0 %v401
    %v441 = vpop.f32.mrf.mxu0
    %v442 = vadd.f32 0.0, %v441
    %443 = vmatmul.f32.gmra.mxu0 %v404
    %v444 = vpop.f32.mrf.mxu0
    %v445 = vadd.f32 0.0, %v444
    %446 = vmatmul.f32.gmra.mxu0 %v407
    %v447 = vpop.f32.mrf.mxu0
    %v448 = vadd.f32 0.0, %v447
    %449 = vmatmul.f32.gmra.mxu0 %v410
    %v450 = vpop.f32.mrf.mxu0
    %v451 = vadd.f32 0.0, %v450
    %452 = vmatmul.f32.gmra.mxu0 %v413
    %v453 = vpop.f32.mrf.mxu0
    %v454 = vadd.f32 0.0, %v453
    %455 = vmatmul.f32.gmra.mxu0 %v416
    %v456 = vpop.f32.mrf.mxu0
    %v457 = vadd.f32 0.0, %v456
    %458 = vmatmul.f32.gmra.mxu0 %v419
    %v459 = vpop.f32.mrf.mxu0
    %v460 = vadd.f32 0.0, %v459
    %461 = vmatmul.f32.gmra.mxu0 %v422
    %v462 = vpop.f32.mrf.mxu0
    %v463 = vadd.f32 0.0, %v462
    %464 = vdwg.mxu0
    %v465 = vadd.f32 %v375, %v442
    %v466 = vadd.f32 %v378, %v445
    %v467 = vadd.f32 %v381, %v448
    %v468 = vadd.f32 %v384, %v451
    %v469 = vadd.f32 %v387, %v454
    %v470 = vadd.f32 %v390, %v457
    %v471 = vadd.f32 %v393, %v460
    %v472 = vadd.f32 %v396, %v463
    %v473 = vld [vmem:[#allocation9 + $0x10] sm:$0xff]
    %v474 = vld [vmem:[#allocation9 + $0x18] sm:$0xff]
    %v476 = vsel %vm219, %v207, 0
    %v479 = vsel %vm219, %v208, 0
    %v482 = vsel %vm219, %v209, 0
    %v485 = vsel %vm219, %v210, 0
    %v488 = vsel %vm219, %v211, 0
    %v491 = vsel %vm219, %v212, 0
    %v494 = vsel %vm219, %v213, 0
    %v497 = vsel %vm219, %v214, 0
    %499 = vmatpush.msra.mxu0 0.0
    %500 = vmatpush.msra.mxu0 0.0
    %501 = vmatpush.msra.mxu0 0.0
    %502 = vmatpush.msra.mxu0 0.0
    %503 = vmatpush.msra.mxu0 0.0
    %504 = vmatpush.msra.mxu0 0.0
    %505 = vmatpush.msra.mxu0 0.0
    %506 = vmatpush.msra.mxu0 0.0
    %507 = vmatpush.msra.mxu0 0.0
    %508 = vmatpush.msra.mxu0 0.0
    %509 = vmatpush.msra.mxu0 0.0
    %510 = vmatpush.msra.mxu0 0.0
    %511 = vmatpush.msra.mxu0 0.0
    %512 = vmatpush.msra.mxu0 0.0
    %513 = vmatpush.msra.mxu0 %v474
    %514 = vmatpush.msra.mxu0 %v473
    %515 = vmatmul.f32.gmra.mxu0 %v476
    %v516 = vpop.f32.mrf.mxu0
    %v517 = vadd.f32 0.0, %v516
    %518 = vmatmul.f32.gmra.mxu0 %v479
    %v519 = vpop.f32.mrf.mxu0
    %v520 = vadd.f32 0.0, %v519
    %521 = vmatmul.f32.gmra.mxu0 %v482
    %v522 = vpop.f32.mrf.mxu0
    %v523 = vadd.f32 0.0, %v522
    %524 = vmatmul.f32.gmra.mxu0 %v485
    %v525 = vpop.f32.mrf.mxu0
    %v526 = vadd.f32 0.0, %v525
    %527 = vmatmul.f32.gmra.mxu0 %v488
    %v528 = vpop.f32.mrf.mxu0
    %v529 = vadd.f32 0.0, %v528
    %530 = vmatmul.f32.gmra.mxu0 %v491
    %v531 = vpop.f32.mrf.mxu0
    %v532 = vadd.f32 0.0, %v531
    %533 = vmatmul.f32.gmra.mxu0 %v494
    %v534 = vpop.f32.mrf.mxu0
    %v535 = vadd.f32 0.0, %v534
    %536 = vmatmul.f32.gmra.mxu0 %v497
    %v537 = vpop.f32.mrf.mxu0
    %v538 = vadd.f32 0.0, %v537
    %539 = vdwg.mxu0
    %v540 = vadd.f32 %v465, %v517
    %v541 = vadd.f32 %v466, %v520
    %v542 = vadd.f32 %v467, %v523
    %v543 = vadd.f32 %v468, %v526
    %v544 = vadd.f32 %v469, %v529
    %v545 = vadd.f32 %v470, %v532
    %v546 = vadd.f32 %v471, %v535
    %v547 = vadd.f32 %v472, %v538
    %v549 = vrot.slane %v262, 1
    %v550 = vrot.slane %v262, 2
    %v551 = vrot.slane %v262, 3
    %v552 = vrot.slane %v262, 4
    %v553 = vrot.slane %v262, 5
    %v554 = vrot.slane %v262, 6
    %v555 = vrot.slane %v262, 7
    %v556 = vperm.slane %v262, 0
    %v557 = vperm.slane %v549, 0
    %v558 = vperm.slane %v550, 0
    %v559 = vperm.slane %v551, 0
    %v560 = vperm.slane %v552, 0
    %v561 = vperm.slane %v553, 0
    %v562 = vperm.slane %v554, 0
    %v563 = vperm.slane %v555, 0
    %v572 = vadd.f32 %v540, %v556
    %v573 = vadd.f32 %v541, %v557
    %v574 = vadd.f32 %v542, %v558
    %v575 = vadd.f32 %v543, %v559
    %v576 = vadd.f32 %v544, %v560
    %v577 = vadd.f32 %v545, %v561
    %v578 = vadd.f32 %v546, %v562
    %v579 = vadd.f32 %v547, %v563
    %v581 = vperm.slane %v143, 0
    %v583 = vadd.f32 %v572, %v581
    %v584 = vadd.f32 %v573, %v581
    %v585 = vadd.f32 %v574, %v581
    %v586 = vadd.f32 %v575, %v581
    %v587 = vadd.f32 %v576, %v581
    %v588 = vadd.f32 %v577, %v581
    %v589 = vadd.f32 %v578, %v581
    %v590 = vadd.f32 %v579, %v581
    %v591 = vxor.u32 %v583, 2147483648
    %v592 = vxor.u32 %v584, 2147483648
    %v593 = vxor.u32 %v585, 2147483648
    %v594 = vxor.u32 %v586, 2147483648
    %v595 = vxor.u32 %v587, 2147483648
    %v596 = vxor.u32 %v588, 2147483648
    %v597 = vxor.u32 %v589, 2147483648
    %v598 = vxor.u32 %v590, 2147483648
    %v599 = vmul.f32 %v591, 1.442695
    %v600 = vpow.pop %v599
    %v601 = vmul.f32 %v592, 1.442695
    %v602 = vpow.pop %v601
    %v603 = vmul.f32 %v593, 1.442695
    %v604 = vpow.pop %v603
    %v605 = vmul.f32 %v594, 1.442695
    %v606 = vpow.pop %v605
    %v607 = vmul.f32 %v595, 1.442695
    %v608 = vpow.pop %v607
    %v609 = vmul.f32 %v596, 1.442695
    %v610 = vpow.pop %v609
    %v611 = vmul.f32 %v597, 1.442695
    %v612 = vpow.pop %v611
    %v613 = vmul.f32 %v598, 1.442695
    %v614 = vpow.pop %v613
    %v615 = vadd.f32 %v600, 1.0
    %v616 = vadd.f32 %v602, 1.0
    %v617 = vadd.f32 %v604, 1.0
    %v618 = vadd.f32 %v606, 1.0
    %v619 = vadd.f32 %v608, 1.0
    %v620 = vadd.f32 %v610, 1.0
    %v621 = vadd.f32 %v612, 1.0
    %v622 = vadd.f32 %v614, 1.0
    %v623 = vrcp.pop %v615
    %v624 = vmul.f32 %v615, %v623
    %v625 = vsub.f32 1.0, %v624
    %v626 = vmul.f32 %v623, %v625
    %v627 = vadd.f32 %v623, %v626
    %vm628 = vweird.f32 %v615
    %vm629 = vweird.f32 %v623
    %vm630 = vmor %vm628, %vm629
    %v631 = vsel %vm630, %v623, %v627
    %v632 = vand.u32 2147483647, %v615
    %vm633 = vcmp.eq.f32.partialorder %v632, 8.507059e+37
    %v634 = vand.u32 %v615, 2147483648
    %v635 = vor.u32 1.1754944e-38, %v634
    %v636 = vsel %vm633, %v635, %v631
    %v637 = vmul.f32 1.0, %v636
    %v638 = vrcp.pop %v616
    %v639 = vmul.f32 %v616, %v638
    %v640 = vsub.f32 1.0, %v639
    %v641 = vmul.f32 %v638, %v640
    %v642 = vadd.f32 %v638, %v641
    %vm643 = vweird.f32 %v616
    %vm644 = vweird.f32 %v638
    %vm645 = vmor %vm643, %vm644
    %v646 = vsel %vm645, %v638, %v642
    %v647 = vand.u32 2147483647, %v616
    %vm648 = vcmp.eq.f32.partialorder %v647, 8.507059e+37
    %v649 = vand.u32 %v616, 2147483648
    %v650 = vor.u32 1.1754944e-38, %v649
    %v651 = vsel %vm648, %v650, %v646
    %v652 = vmul.f32 1.0, %v651
    %v653 = vrcp.pop %v617
    %v654 = vmul.f32 %v617, %v653
    %v655 = vsub.f32 1.0, %v654
    %v656 = vmul.f32 %v653, %v655
    %v657 = vadd.f32 %v653, %v656
    %vm658 = vweird.f32 %v617
    %vm659 = vweird.f32 %v653
    %vm660 = vmor %vm658, %vm659
    %v661 = vsel %vm660, %v653, %v657
    %v662 = vand.u32 2147483647, %v617
    %vm663 = vcmp.eq.f32.partialorder %v662, 8.507059e+37
    %v664 = vand.u32 %v617, 2147483648
    %v665 = vor.u32 1.1754944e-38, %v664
    %v666 = vsel %vm663, %v665, %v661
    %v667 = vmul.f32 1.0, %v666
    %v668 = vrcp.pop %v618
    %v669 = vmul.f32 %v618, %v668
    %v670 = vsub.f32 1.0, %v669
    %v671 = vmul.f32 %v668, %v670
    %v672 = vadd.f32 %v668, %v671
    %vm673 = vweird.f32 %v618
    %vm674 = vweird.f32 %v668
    %vm675 = vmor %vm673, %vm674
    %v676 = vsel %vm675, %v668, %v672
    %v677 = vand.u32 2147483647, %v618
    %vm678 = vcmp.eq.f32.partialorder %v677, 8.507059e+37
    %v679 = vand.u32 %v618, 2147483648
    %v680 = vor.u32 1.1754944e-38, %v679
    %v681 = vsel %vm678, %v680, %v676
    %v682 = vmul.f32 1.0, %v681
    %v683 = vrcp.pop %v619
    %v684 = vmul.f32 %v619, %v683
    %v685 = vsub.f32 1.0, %v684
    %v686 = vmul.f32 %v683, %v685
    %v687 = vadd.f32 %v683, %v686
    %vm688 = vweird.f32 %v619
    %vm689 = vweird.f32 %v683
    %vm690 = vmor %vm688, %vm689
    %v691 = vsel %vm690, %v683, %v687
    %v692 = vand.u32 2147483647, %v619
    %vm693 = vcmp.eq.f32.partialorder %v692, 8.507059e+37
    %v694 = vand.u32 %v619, 2147483648
    %v695 = vor.u32 1.1754944e-38, %v694
    %v696 = vsel %vm693, %v695, %v691
    %v697 = vmul.f32 1.0, %v696
    %v698 = vrcp.pop %v620
    %v699 = vmul.f32 %v620, %v698
    %v700 = vsub.f32 1.0, %v699
    %v701 = vmul.f32 %v698, %v700
    %v702 = vadd.f32 %v698, %v701
    %vm703 = vweird.f32 %v620
    %vm704 = vweird.f32 %v698
    %vm705 = vmor %vm703, %vm704
    %v706 = vsel %vm705, %v698, %v702
    %v707 = vand.u32 2147483647, %v620
    %vm708 = vcmp.eq.f32.partialorder %v707, 8.507059e+37
    %v709 = vand.u32 %v620, 2147483648
    %v710 = vor.u32 1.1754944e-38, %v709
    %v711 = vsel %vm708, %v710, %v706
    %v712 = vmul.f32 1.0, %v711
    %v713 = vrcp.pop %v621
    %v714 = vmul.f32 %v621, %v713
    %v715 = vsub.f32 1.0, %v714
    %v716 = vmul.f32 %v713, %v715
    %v717 = vadd.f32 %v713, %v716
    %vm718 = vweird.f32 %v621
    %vm719 = vweird.f32 %v713
    %vm720 = vmor %vm718, %vm719
    %v721 = vsel %vm720, %v713, %v717
    %v722 = vand.u32 2147483647, %v621
    %vm723 = vcmp.eq.f32.partialorder %v722, 8.507059e+37
    %v724 = vand.u32 %v621, 2147483648
    %v725 = vor.u32 1.1754944e-38, %v724
    %v726 = vsel %vm723, %v725, %v721
    %v727 = vmul.f32 1.0, %v726
    %v728 = vrcp.pop %v622
    %v729 = vmul.f32 %v622, %v728
    %v730 = vsub.f32 1.0, %v729
    %v731 = vmul.f32 %v728, %v730
    %v732 = vadd.f32 %v728, %v731
    %vm733 = vweird.f32 %v622
    %vm734 = vweird.f32 %v728
    %vm735 = vmor %vm733, %vm734
    %v736 = vsel %vm735, %v728, %v732
    %v737 = vand.u32 2147483647, %v622
    %vm738 = vcmp.eq.f32.partialorder %v737, 8.507059e+37
    %v739 = vand.u32 %v622, 2147483648
    %v740 = vor.u32 1.1754944e-38, %v739
    %v741 = vsel %vm738, %v740, %v736
    %v742 = vmul.f32 1.0, %v741
    %v743 = vld [vmem:[%s9] sm:$0xff]
    %v744 = vld [vmem:[%s9 + $0x8] sm:$0xff]
    %v745 = vld [vmem:[%s9 + $0x10] sm:$0xff]
    %v746 = vld [vmem:[%s9 + $0x18] sm:$0xff]
    %v747 = vld [vmem:[%s9 + $0x20] sm:$0xff]
    %v748 = vld [vmem:[%s9 + $0x28] sm:$0xff]
    %v749 = vld [vmem:[%s9 + $0x30] sm:$0xff]
    %v750 = vld [vmem:[%s9 + $0x38] sm:$0xff]
    %v751 = vld [vmem:[%s9 + $0x40] sm:$0xff]
    %v752 = vld [vmem:[%s9 + $0x48] sm:$0xff]
    %v754 = vperm.slane %v144, 0
    %vm756 = vcmask 654336
    %v758 = vsel %vm756, %v637, 0
    %v761 = vsel %vm756, %v652, 0
    %v764 = vsel %vm756, %v667, 0
    %v767 = vsel %vm756, %v682, 0
    %v770 = vsel %vm756, %v697, 0
    %v773 = vsel %vm756, %v712, 0
    %v776 = vsel %vm756, %v727, 0
    %v779 = vsel %vm756, %v742, 0
    %781 = vmatpush.msra.mxu0 0.0
    %782 = vmatpush.msra.mxu0 0.0
    %783 = vmatpush.msra.mxu0 0.0
    %784 = vmatpush.msra.mxu0 0.0
    %785 = vmatpush.msra.mxu0 0.0
    %786 = vmatpush.msra.mxu0 0.0
    %787 = vmatpush.msra.mxu0 %v752
    %788 = vmatpush.msra.mxu0 %v751
    %789 = vmatpush.msra.mxu0 %v750
    %790 = vmatpush.msra.mxu0 %v749
    %791 = vmatpush.msra.mxu0 %v748
    %792 = vmatpush.msra.mxu0 %v747
    %793 = vmatpush.msra.mxu0 %v746
    %794 = vmatpush.msra.mxu0 %v745
    %795 = vmatpush.msra.mxu0 %v744
    %796 = vmatpush.msra.mxu0 %v743
    %797 = vmatmul.f32.gmra.mxu0 %v758
    %v798 = vpop.f32.mrf.mxu0
    %v799 = vadd.f32 %v754, %v798
    %800 = vmatmul.f32.gmra.mxu0 %v761
    %v801 = vpop.f32.mrf.mxu0
    %v802 = vadd.f32 %v754, %v801
    %803 = vmatmul.f32.gmra.mxu0 %v764
    %v804 = vpop.f32.mrf.mxu0
    %v805 = vadd.f32 %v754, %v804
    %806 = vmatmul.f32.gmra.mxu0 %v767
    %v807 = vpop.f32.mrf.mxu0
    %v808 = vadd.f32 %v754, %v807
    %809 = vmatmul.f32.gmra.mxu0 %v770
    %v810 = vpop.f32.mrf.mxu0
    %v811 = vadd.f32 %v754, %v810
    %812 = vmatmul.f32.gmra.mxu0 %v773
    %v813 = vpop.f32.mrf.mxu0
    %v814 = vadd.f32 %v754, %v813
    %815 = vmatmul.f32.gmra.mxu0 %v776
    %v816 = vpop.f32.mrf.mxu0
    %v817 = vadd.f32 %v754, %v816
    %818 = vmatmul.f32.gmra.mxu0 %v779
    %v819 = vpop.f32.mrf.mxu0
    %v820 = vadd.f32 %v754, %v819
    %821 = vdwg.mxu0
    %v822 = vxor.u32 %v799, 2147483648
    %v823 = vxor.u32 %v802, 2147483648
    %v824 = vxor.u32 %v805, 2147483648
    %v825 = vxor.u32 %v808, 2147483648
    %v826 = vxor.u32 %v811, 2147483648
    %v827 = vxor.u32 %v814, 2147483648
    %v828 = vxor.u32 %v817, 2147483648
    %v829 = vxor.u32 %v820, 2147483648
    %v830 = vmul.f32 %v822, 1.442695
    %v831 = vpow.pop %v830
    %v832 = vmul.f32 %v823, 1.442695
    %v833 = vpow.pop %v832
    %v834 = vmul.f32 %v824, 1.442695
    %v835 = vpow.pop %v834
    %v836 = vmul.f32 %v825, 1.442695
    %v837 = vpow.pop %v836
    %v838 = vmul.f32 %v826, 1.442695
    %v839 = vpow.pop %v838
    %v840 = vmul.f32 %v827, 1.442695
    %v841 = vpow.pop %v840
    %v842 = vmul.f32 %v828, 1.442695
    %v843 = vpow.pop %v842
    %v844 = vmul.f32 %v829, 1.442695
    %v845 = vpow.pop %v844
    %v846 = vadd.f32 %v831, 1.0
    %v847 = vadd.f32 %v833, 1.0
    %v848 = vadd.f32 %v835, 1.0
    %v849 = vadd.f32 %v837, 1.0
    %v850 = vadd.f32 %v839, 1.0
    %v851 = vadd.f32 %v841, 1.0
    %v852 = vadd.f32 %v843, 1.0
    %v853 = vadd.f32 %v845, 1.0
    %v854 = vrcp.pop %v846
    %v855 = vmul.f32 %v846, %v854
    %v856 = vsub.f32 1.0, %v855
    %v857 = vmul.f32 %v854, %v856
    %v858 = vadd.f32 %v854, %v857
    %vm859 = vweird.f32 %v846
    %vm860 = vweird.f32 %v854
    %vm861 = vmor %vm859, %vm860
    %v862 = vsel %vm861, %v854, %v858
    %v863 = vand.u32 2147483647, %v846
    %vm864 = vcmp.eq.f32.partialorder %v863, 8.507059e+37
    %v865 = vand.u32 %v846, 2147483648
    %v866 = vor.u32 1.1754944e-38, %v865
    %v867 = vsel %vm864, %v866, %v862
    %v868 = vmul.f32 1.0, %v867
    %v869 = vrcp.pop %v847
    %v870 = vmul.f32 %v847, %v869
    %v871 = vsub.f32 1.0, %v870
    %v872 = vmul.f32 %v869, %v871
    %v873 = vadd.f32 %v869, %v872
    %vm874 = vweird.f32 %v847
    %vm875 = vweird.f32 %v869
    %vm876 = vmor %vm874, %vm875
    %v877 = vsel %vm876, %v869, %v873
    %v878 = vand.u32 2147483647, %v847
    %vm879 = vcmp.eq.f32.partialorder %v878, 8.507059e+37
    %v880 = vand.u32 %v847, 2147483648
    %v881 = vor.u32 1.1754944e-38, %v880
    %v882 = vsel %vm879, %v881, %v877
    %v883 = vmul.f32 1.0, %v882
    %v884 = vrcp.pop %v848
    %v885 = vmul.f32 %v848, %v884
    %v886 = vsub.f32 1.0, %v885
    %v887 = vmul.f32 %v884, %v886
    %v888 = vadd.f32 %v884, %v887
    %vm889 = vweird.f32 %v848
    %vm890 = vweird.f32 %v884
    %vm891 = vmor %vm889, %vm890
    %v892 = vsel %vm891, %v884, %v888
    %v893 = vand.u32 2147483647, %v848
    %vm894 = vcmp.eq.f32.partialorder %v893, 8.507059e+37
    %v895 = vand.u32 %v848, 2147483648
    %v896 = vor.u32 1.1754944e-38, %v895
    %v897 = vsel %vm894, %v896, %v892
    %v898 = vmul.f32 1.0, %v897
    %v899 = vrcp.pop %v849
    %v900 = vmul.f32 %v849, %v899
    %v901 = vsub.f32 1.0, %v900
    %v902 = vmul.f32 %v899, %v901
    %v903 = vadd.f32 %v899, %v902
    %vm904 = vweird.f32 %v849
    %vm905 = vweird.f32 %v899
    %vm906 = vmor %vm904, %vm905
    %v907 = vsel %vm906, %v899, %v903
    %v908 = vand.u32 2147483647, %v849
    %vm909 = vcmp.eq.f32.partialorder %v908, 8.507059e+37
    %v910 = vand.u32 %v849, 2147483648
    %v911 = vor.u32 1.1754944e-38, %v910
    %v912 = vsel %vm909, %v911, %v907
    %v913 = vmul.f32 1.0, %v912
    %v914 = vrcp.pop %v850
    %v915 = vmul.f32 %v850, %v914
    %v916 = vsub.f32 1.0, %v915
    %v917 = vmul.f32 %v914, %v916
    %v918 = vadd.f32 %v914, %v917
    %vm919 = vweird.f32 %v850
    %vm920 = vweird.f32 %v914
    %vm921 = vmor %vm919, %vm920
    %v922 = vsel %vm921, %v914, %v918
    %v923 = vand.u32 2147483647, %v850
    %vm924 = vcmp.eq.f32.partialorder %v923, 8.507059e+37
    %v925 = vand.u32 %v850, 2147483648
    %v926 = vor.u32 1.1754944e-38, %v925
    %v927 = vsel %vm924, %v926, %v922
    %v928 = vmul.f32 1.0, %v927
    %v929 = vrcp.pop %v851
    %v930 = vmul.f32 %v851, %v929
    %v931 = vsub.f32 1.0, %v930
    %v932 = vmul.f32 %v929, %v931
    %v933 = vadd.f32 %v929, %v932
    %vm934 = vweird.f32 %v851
    %vm935 = vweird.f32 %v929
    %vm936 = vmor %vm934, %vm935
    %v937 = vsel %vm936, %v929, %v933
    %v938 = vand.u32 2147483647, %v851
    %vm939 = vcmp.eq.f32.partialorder %v938, 8.507059e+37
    %v940 = vand.u32 %v851, 2147483648
    %v941 = vor.u32 1.1754944e-38, %v940
    %v942 = vsel %vm939, %v941, %v937
    %v943 = vmul.f32 1.0, %v942
    %v944 = vrcp.pop %v852
    %v945 = vmul.f32 %v852, %v944
    %v946 = vsub.f32 1.0, %v945
    %v947 = vmul.f32 %v944, %v946
    %v948 = vadd.f32 %v944, %v947
    %vm949 = vweird.f32 %v852
    %vm950 = vweird.f32 %v944
    %vm951 = vmor %vm949, %vm950
    %v952 = vsel %vm951, %v944, %v948
    %v953 = vand.u32 2147483647, %v852
    %vm954 = vcmp.eq.f32.partialorder %v953, 8.507059e+37
    %v955 = vand.u32 %v852, 2147483648
    %v956 = vor.u32 1.1754944e-38, %v955
    %v957 = vsel %vm954, %v956, %v952
    %v958 = vmul.f32 1.0, %v957
    %v959 = vrcp.pop %v853
    %v960 = vmul.f32 %v853, %v959
    %v961 = vsub.f32 1.0, %v960
    %v962 = vmul.f32 %v959, %v961
    %v963 = vadd.f32 %v959, %v962
    %vm964 = vweird.f32 %v853
    %vm965 = vweird.f32 %v959
    %vm966 = vmor %vm964, %vm965
    %v967 = vsel %vm966, %v959, %v963
    %v968 = vand.u32 2147483647, %v853
    %vm969 = vcmp.eq.f32.partialorder %v968, 8.507059e+37
    %v970 = vand.u32 %v853, 2147483648
    %v971 = vor.u32 1.1754944e-38, %v970
    %v972 = vsel %vm969, %v971, %v967
    %v973 = vmul.f32 1.0, %v972
    %v974 = vld [vmem:[%s10] sm:$0x1]
    %v976 = vperm.slane %v974, 0
    %v978 = vmul.f32 %v868, %v976
    %v979 = vmul.f32 %v883, %v976
    %v980 = vmul.f32 %v898, %v976
    %v981 = vmul.f32 %v913, %v976
    %v982 = vmul.f32 %v928, %v976
    %v983 = vmul.f32 %v943, %v976
    %v984 = vmul.f32 %v958, %v976
    %v985 = vmul.f32 %v973, %v976
    %vm986 = vcmask 326656
    %v987 = vsel %vm986, %v978, 0.0
    %988 = vadd.xlane.f32.xlu0 %v987
    %v989 = vpop.xlane.xlu0 %988
    %v990 = vsel %vm986, %v979, 0.0
    %991 = vadd.xlane.f32.xlu0 %v990
    %v992 = vpop.xlane.xlu0 %991
    %v993 = vsel %vm986, %v980, 0.0
    %994 = vadd.xlane.f32.xlu0 %v993
    %v995 = vpop.xlane.xlu0 %994
    %v996 = vsel %vm986, %v981, 0.0
    %997 = vadd.xlane.f32.xlu0 %v996
    %v998 = vpop.xlane.xlu0 %997
    %v999 = vsel %vm986, %v982, 0.0
    %1000 = vadd.xlane.f32.xlu0 %v999
    %v1001 = vpop.xlane.xlu0 %1000
    %v1002 = vsel %vm986, %v983, 0.0
    %1003 = vadd.xlane.f32.xlu0 %v1002
    %v1004 = vpop.xlane.xlu0 %1003
    %v1005 = vsel %vm986, %v984, 0.0
    %1006 = vadd.xlane.f32.xlu0 %v1005
    %v1007 = vpop.xlane.xlu0 %1006
    %v1008 = vsel %vm986, %v985, 0.0
    %1009 = vadd.xlane.f32.xlu0 %v1008
    %v1010 = vpop.xlane.xlu0 %1009
    %v1012 = vperm.slane %v145, 0
    %1013 = vset.pattern.permute.xlu0 0
    %1014 = vperm.xlu0 %1013, %v1012
    %v1015 = vpop.permute.xlu0 %1014
    %v1017 = vadd.f32 %v989, %v1015
    %v1018 = vadd.f32 %v992, %v1015
    %v1019 = vadd.f32 %v995, %v1015
    %v1020 = vadd.f32 %v998, %v1015
    %v1021 = vadd.f32 %v1001, %v1015
    %v1022 = vadd.f32 %v1004, %v1015
    %v1023 = vadd.f32 %v1007, %v1015
    %v1024 = vadd.f32 %v1010, %v1015
    %vm1025 = vcmp.gt.f32.partialorder %v142, 0.0
    %v1034 = vlaneseq
    %v1035 = vand.u32 %v1034, 127
    %v1036 = vperm.slane %v1017, %v1035
    %v1037 = vperm.slane %v1018, %v1035
    %v1038 = vperm.slane %v1019, %v1035
    %v1039 = vperm.slane %v1020, %v1035
    %v1040 = vperm.slane %v1021, %v1035
    %v1041 = vperm.slane %v1022, %v1035
    %v1042 = vperm.slane %v1023, %v1035
    %v1043 = vperm.slane %v1024, %v1035
    %vm1044 = vcmask 1041409
    %v1045 = vsel %vm1044, %v1037, %v1036
    %vm1046 = vcmask 1042434
    %v1047 = vsel %vm1046, %v1038, %v1045
    %vm1048 = vcmask 1043459
    %v1049 = vsel %vm1048, %v1039, %v1047
    %vm1050 = vcmask 1044484
    %v1051 = vsel %vm1050, %v1040, %v1049
    %vm1052 = vcmask 1045509
    %v1053 = vsel %vm1052, %v1041, %v1051
    %vm1054 = vcmask 1046534
    %v1055 = vsel %vm1054, %v1042, %v1053
    %vm1056 = vcmask 1047559
    %v1057 = vsel %vm1056, %v1043, %v1055
    %v1059 = vsel %vm1025, %v1057, -4.2949673e+09
    %vm1060 = vcmask 64512
    %v1061 = vsel %vm1060, %v1059, -inf
    %1062 = vmax.xlane.f32.xlu0 %v1061
    %v1063 = vpop.xlane.xlu0 %1062
    %v1064 = vsub.f32 %v1059, %v1063
    %v1065 = vmul.f32 %v1064, 1.442695
    %v1066 = vpow.pop %v1065
    %v1067 = vsel %vm1060, %v1066, 0.0
    %1068 = vadd.xlane.f32.xlu0 %v1067
    %v1069 = vpop.xlane.xlu0 %1068
    %v1070 = vrcp.pop %v1069
    %v1071 = vmul.f32 %v1066, %v1070
    %v1072 = vperm.slane %v1071, 0
    %v1073 = vlaneseq
    %v1074 = vshrl.u32 %v1073, 7
    %1076 = vset.pattern.permute.xlu0 %v1074
    %1077 = vperm.xlu0 %1076, %v1072
    %v1078 = vpop.permute.xlu0 %1077
    %v1079 = vperm.slane %v1071, 1
    %v1080 = vlaneseq
    %v1081 = vshrl.u32 %v1080, 7
    %1083 = vset.pattern.permute.xlu0 %v1081
    %1084 = vperm.xlu0 %1083, %v1079
    %v1085 = vpop.permute.xlu0 %1084
    %v1086 = vperm.slane %v1071, 2
    %v1087 = vlaneseq
    %v1088 = vshrl.u32 %v1087, 7
    %1090 = vset.pattern.permute.xlu0 %v1088
    %1091 = vperm.xlu0 %1090, %v1086
    %v1092 = vpop.permute.xlu0 %1091
    %v1093 = vperm.slane %v1071, 3
    %v1094 = vlaneseq
    %v1095 = vshrl.u32 %v1094, 7
    %1097 = vset.pattern.permute.xlu0 %v1095
    %1098 = vperm.xlu0 %1097, %v1093
    %v1099 = vpop.permute.xlu0 %1098
    %v1100 = vperm.slane %v1071, 4
    %v1101 = vlaneseq
    %v1102 = vshrl.u32 %v1101, 7
    %1104 = vset.pattern.permute.xlu0 %v1102
    %1105 = vperm.xlu0 %1104, %v1100
    %v1106 = vpop.permute.xlu0 %1105
    %v1107 = vperm.slane %v1071, 5
    %v1108 = vlaneseq
    %v1109 = vshrl.u32 %v1108, 7
    %1111 = vset.pattern.permute.xlu0 %v1109
    %1112 = vperm.xlu0 %1111, %v1107
    %v1113 = vpop.permute.xlu0 %1112
    %v1114 = vperm.slane %v1071, 6
    %v1115 = vlaneseq
    %v1116 = vshrl.u32 %v1115, 7
    %1118 = vset.pattern.permute.xlu0 %v1116
    %1119 = vperm.xlu0 %1118, %v1114
    %v1120 = vpop.permute.xlu0 %1119
    %v1121 = vperm.slane %v1071, 7
    %v1122 = vlaneseq
    %v1123 = vshrl.u32 %v1122, 7
    %1125 = vset.pattern.permute.xlu0 %v1123
    %1126 = vperm.xlu0 %1125, %v1121
    %v1127 = vpop.permute.xlu0 %1126
    %v1128 = vmul.f32 %v1078, %v126
    %v1129 = vmul.f32 %v1085, %v127
    %v1130 = vmul.f32 %v1092, %v128
    %v1131 = vmul.f32 %v1099, %v129
    %v1132 = vmul.f32 %v1106, %v130
    %v1133 = vmul.f32 %v1113, %v131
    %v1134 = vmul.f32 %v1120, %v132
    %v1135 = vmul.f32 %v1127, %v133
    %v1136 = vsel %vm219, %v1128, 0.0
    %v1137 = vrot.slane %v1136, 4
    %v1138 = vadd.f32 %v1136, %v1137
    %v1139 = vrot.slane %v1138, 2
    %v1140 = vadd.f32 %v1138, %v1139
    %v1141 = vrot.slane %v1140, 1
    %v1142 = vadd.f32 %v1140, %v1141
    %v1143 = vsel %vm219, %v1129, 0.0
    %v1144 = vrot.slane %v1143, 4
    %v1145 = vadd.f32 %v1143, %v1144
    %v1146 = vrot.slane %v1145, 2
    %v1147 = vadd.f32 %v1145, %v1146
    %v1148 = vrot.slane %v1147, 1
    %v1149 = vadd.f32 %v1147, %v1148
    %v1150 = vsel %vm219, %v1130, 0.0
    %v1151 = vrot.slane %v1150, 4
    %v1152 = vadd.f32 %v1150, %v1151
    %v1153 = vrot.slane %v1152, 2
    %v1154 = vadd.f32 %v1152, %v1153
    %v1155 = vrot.slane %v1154, 1
    %v1156 = vadd.f32 %v1154, %v1155
    %v1157 = vsel %vm219, %v1131, 0.0
    %v1158 = vrot.slane %v1157, 4
    %v1159 = vadd.f32 %v1157, %v1158
    %v1160 = vrot.slane %v1159, 2
    %v1161 = vadd.f32 %v1159, %v1160
    %v1162 = vrot.slane %v1161, 1
    %v1163 = vadd.f32 %v1161, %v1162
    %v1164 = vsel %vm219, %v1132, 0.0
    %v1165 = vrot.slane %v1164, 4
    %v1166 = vadd.f32 %v1164, %v1165
    %v1167 = vrot.slane %v1166, 2
    %v1168 = vadd.f32 %v1166, %v1167
    %v1169 = vrot.slane %v1168, 1
    %v1170 = vadd.f32 %v1168, %v1169
    %v1171 = vsel %vm219, %v1133, 0.0
    %v1172 = vrot.slane %v1171, 4
    %v1173 = vadd.f32 %v1171, %v1172
    %v1174 = vrot.slane %v1173, 2
    %v1175 = vadd.f32 %v1173, %v1174
    %v1176 = vrot.slane %v1175, 1
    %v1177 = vadd.f32 %v1175, %v1176
    %v1178 = vsel %vm219, %v1134, 0.0
    %v1179 = vrot.slane %v1178, 4
    %v1180 = vadd.f32 %v1178, %v1179
    %v1181 = vrot.slane %v1180, 2
    %v1182 = vadd.f32 %v1180, %v1181
    %v1183 = vrot.slane %v1182, 1
    %v1184 = vadd.f32 %v1182, %v1183
    %v1185 = vsel %vm219, %v1135, 0.0
    %v1186 = vrot.slane %v1185, 4
    %v1187 = vadd.f32 %v1185, %v1186
    %v1188 = vrot.slane %v1187, 2
    %v1189 = vadd.f32 %v1187, %v1188
    %v1190 = vrot.slane %v1189, 1
    %v1191 = vadd.f32 %v1189, %v1190
    %v1192 = vmul.f32 %v1078, %v134
    %v1193 = vmul.f32 %v1085, %v135
    %v1194 = vmul.f32 %v1092, %v136
    %v1195 = vmul.f32 %v1099, %v137
    %v1196 = vmul.f32 %v1106, %v138
    %v1197 = vmul.f32 %v1113, %v139
    %v1198 = vmul.f32 %v1120, %v140
    %v1199 = vmul.f32 %v1127, %v141
    %v1200 = vsel %vm219, %v1192, 0.0
    %v1201 = vrot.slane %v1200, 4
    %v1202 = vadd.f32 %v1200, %v1201
    %v1203 = vrot.slane %v1202, 2
    %v1204 = vadd.f32 %v1202, %v1203
    %v1205 = vrot.slane %v1204, 1
    %v1206 = vadd.f32 %v1204, %v1205
    %v1207 = vsel %vm219, %v1193, 0.0
    %v1208 = vrot.slane %v1207, 4
    %v1209 = vadd.f32 %v1207, %v1208
    %v1210 = vrot.slane %v1209, 2
    %v1211 = vadd.f32 %v1209, %v1210
    %v1212 = vrot.slane %v1211, 1
    %v1213 = vadd.f32 %v1211, %v1212
    %v1214 = vsel %vm219, %v1194, 0.0
    %v1215 = vrot.slane %v1214, 4
    %v1216 = vadd.f32 %v1214, %v1215
    %v1217 = vrot.slane %v1216, 2
    %v1218 = vadd.f32 %v1216, %v1217
    %v1219 = vrot.slane %v1218, 1
    %v1220 = vadd.f32 %v1218, %v1219
    %v1221 = vsel %vm219, %v1195, 0.0
    %v1222 = vrot.slane %v1221, 4
    %v1223 = vadd.f32 %v1221, %v1222
    %v1224 = vrot.slane %v1223, 2
    %v1225 = vadd.f32 %v1223, %v1224
    %v1226 = vrot.slane %v1225, 1
    %v1227 = vadd.f32 %v1225, %v1226
    %v1228 = vsel %vm219, %v1196, 0.0
    %v1229 = vrot.slane %v1228, 4
    %v1230 = vadd.f32 %v1228, %v1229
    %v1231 = vrot.slane %v1230, 2
    %v1232 = vadd.f32 %v1230, %v1231
    %v1233 = vrot.slane %v1232, 1
    %v1234 = vadd.f32 %v1232, %v1233
    %v1235 = vsel %vm219, %v1197, 0.0
    %v1236 = vrot.slane %v1235, 4
    %v1237 = vadd.f32 %v1235, %v1236
    %v1238 = vrot.slane %v1237, 2
    %v1239 = vadd.f32 %v1237, %v1238
    %v1240 = vrot.slane %v1239, 1
    %v1241 = vadd.f32 %v1239, %v1240
    %v1242 = vsel %vm219, %v1198, 0.0
    %v1243 = vrot.slane %v1242, 4
    %v1244 = vadd.f32 %v1242, %v1243
    %v1245 = vrot.slane %v1244, 2
    %v1246 = vadd.f32 %v1244, %v1245
    %v1247 = vrot.slane %v1246, 1
    %v1248 = vadd.f32 %v1246, %v1247
    %v1249 = vsel %vm219, %v1199, 0.0
    %v1250 = vrot.slane %v1249, 4
    %v1251 = vadd.f32 %v1249, %v1250
    %v1252 = vrot.slane %v1251, 2
    %v1253 = vadd.f32 %v1251, %v1252
    %v1254 = vrot.slane %v1253, 1
    %v1255 = vadd.f32 %v1253, %v1254
    %v1256 = vsel %vm219, %v126, 0.0
    %v1257 = vrot.slane %v1256, 4
    %v1258 = vadd.f32 %v1256, %v1257
    %v1259 = vrot.slane %v1258, 2
    %v1260 = vadd.f32 %v1258, %v1259
    %v1261 = vrot.slane %v1260, 1
    %v1262 = vadd.f32 %v1260, %v1261
    %v1263 = vsel %vm219, %v127, 0.0
    %v1264 = vrot.slane %v1263, 4
    %v1265 = vadd.f32 %v1263, %v1264
    %v1266 = vrot.slane %v1265, 2
    %v1267 = vadd.f32 %v1265, %v1266
    %v1268 = vrot.slane %v1267, 1
    %v1269 = vadd.f32 %v1267, %v1268
    %v1270 = vsel %vm219, %v128, 0.0
    %v1271 = vrot.slane %v1270, 4
    %v1272 = vadd.f32 %v1270, %v1271
    %v1273 = vrot.slane %v1272, 2
    %v1274 = vadd.f32 %v1272, %v1273
    %v1275 = vrot.slane %v1274, 1
    %v1276 = vadd.f32 %v1274, %v1275
    %v1277 = vsel %vm219, %v129, 0.0
    %v1278 = vrot.slane %v1277, 4
    %v1279 = vadd.f32 %v1277, %v1278
    %v1280 = vrot.slane %v1279, 2
    %v1281 = vadd.f32 %v1279, %v1280
    %v1282 = vrot.slane %v1281, 1
    %v1283 = vadd.f32 %v1281, %v1282
    %v1284 = vsel %vm219, %v130, 0.0
    %v1285 = vrot.slane %v1284, 4
    %v1286 = vadd.f32 %v1284, %v1285
    %v1287 = vrot.slane %v1286, 2
    %v1288 = vadd.f32 %v1286, %v1287
    %v1289 = vrot.slane %v1288, 1
    %v1290 = vadd.f32 %v1288, %v1289
    %v1291 = vsel %vm219, %v131, 0.0
    %v1292 = vrot.slane %v1291, 4
    %v1293 = vadd.f32 %v1291, %v1292
    %v1294 = vrot.slane %v1293, 2
    %v1295 = vadd.f32 %v1293, %v1294
    %v1296 = vrot.slane %v1295, 1
    %v1297 = vadd.f32 %v1295, %v1296
    %v1298 = vsel %vm219, %v132, 0.0
    %v1299 = vrot.slane %v1298, 4
    %v1300 = vadd.f32 %v1298, %v1299
    %v1301 = vrot.slane %v1300, 2
    %v1302 = vadd.f32 %v1300, %v1301
    %v1303 = vrot.slane %v1302, 1
    %v1304 = vadd.f32 %v1302, %v1303
    %v1305 = vsel %vm219, %v133, 0.0
    %v1306 = vrot.slane %v1305, 4
    %v1307 = vadd.f32 %v1305, %v1306
    %v1308 = vrot.slane %v1307, 2
    %v1309 = vadd.f32 %v1307, %v1308
    %v1310 = vrot.slane %v1309, 1
    %v1311 = vadd.f32 %v1309, %v1310
    %v1312 = vsel %vm219, %v134, 0.0
    %v1313 = vrot.slane %v1312, 4
    %v1314 = vadd.f32 %v1312, %v1313
    %v1315 = vrot.slane %v1314, 2
    %v1316 = vadd.f32 %v1314, %v1315
    %v1317 = vrot.slane %v1316, 1
    %v1318 = vadd.f32 %v1316, %v1317
    %v1319 = vsel %vm219, %v135, 0.0
    %v1320 = vrot.slane %v1319, 4
    %v1321 = vadd.f32 %v1319, %v1320
    %v1322 = vrot.slane %v1321, 2
    %v1323 = vadd.f32 %v1321, %v1322
    %v1324 = vrot.slane %v1323, 1
    %v1325 = vadd.f32 %v1323, %v1324
    %v1326 = vsel %vm219, %v136, 0.0
    %v1327 = vrot.slane %v1326, 4
    %v1328 = vadd.f32 %v1326, %v1327
    %v1329 = vrot.slane %v1328, 2
    %v1330 = vadd.f32 %v1328, %v1329
    %v1331 = vrot.slane %v1330, 1
    %v1332 = vadd.f32 %v1330, %v1331
    %v1333 = vsel %vm219, %v137, 0.0
    %v1334 = vrot.slane %v1333, 4
    %v1335 = vadd.f32 %v1333, %v1334
    %v1336 = vrot.slane %v1335, 2
    %v1337 = vadd.f32 %v1335, %v1336
    %v1338 = vrot.slane %v1337, 1
    %v1339 = vadd.f32 %v1337, %v1338
    %v1340 = vsel %vm219, %v138, 0.0
    %v1341 = vrot.slane %v1340, 4
    %v1342 = vadd.f32 %v1340, %v1341
    %v1343 = vrot.slane %v1342, 2
    %v1344 = vadd.f32 %v1342, %v1343
    %v1345 = vrot.slane %v1344, 1
    %v1346 = vadd.f32 %v1344, %v1345
    %v1347 = vsel %vm219, %v139, 0.0
    %v1348 = vrot.slane %v1347, 4
    %v1349 = vadd.f32 %v1347, %v1348
    %v1350 = vrot.slane %v1349, 2
    %v1351 = vadd.f32 %v1349, %v1350
    %v1352 = vrot.slane %v1351, 1
    %v1353 = vadd.f32 %v1351, %v1352
    %v1354 = vsel %vm219, %v140, 0.0
    %v1355 = vrot.slane %v1354, 4
    %v1356 = vadd.f32 %v1354, %v1355
    %v1357 = vrot.slane %v1356, 2
    %v1358 = vadd.f32 %v1356, %v1357
    %v1359 = vrot.slane %v1358, 1
    %v1360 = vadd.f32 %v1358, %v1359
    %v1361 = vsel %vm219, %v141, 0.0
    %v1362 = vrot.slane %v1361, 4
    %v1363 = vadd.f32 %v1361, %v1362
    %v1364 = vrot.slane %v1363, 2
    %v1365 = vadd.f32 %v1363, %v1364
    %v1366 = vrot.slane %v1365, 1
    %v1367 = vadd.f32 %v1365, %v1366
    %v1368 = vld [vmem:[#allocation2] sm:$0xff]
    %v1369 = vld [vmem:[%s11] sm:$0xff]
    %v1370 = vld [vmem:[%s11 + $0x8] sm:$0xff]
    %v1371 = vld [vmem:[%s11 + $0x10] sm:$0xff]
    %v1372 = vld [vmem:[%s11 + $0x18] sm:$0xff]
    %v1373 = vld [vmem:[%s11 + $0x20] sm:$0xff]
    %v1374 = vld [vmem:[%s11 + $0x28] sm:$0xff]
    %v1375 = vld [vmem:[%s11 + $0x30] sm:$0xff]
    %v1376 = vld [vmem:[%s11 + $0x38] sm:$0xff]
    %1377 = vmatpush.msra.mxu0 0.0
    %1378 = vmatpush.msra.mxu0 0.0
    %1379 = vmatpush.msra.mxu0 0.0
    %1380 = vmatpush.msra.mxu0 0.0
    %1381 = vmatpush.msra.mxu0 0.0
    %1382 = vmatpush.msra.mxu0 0.0
    %1383 = vmatpush.msra.mxu0 0.0
    %1384 = vmatpush.msra.mxu0 0.0
    %1385 = vmatpush.msra.mxu0 0.0
    %1386 = vmatpush.msra.mxu0 0.0
    %1387 = vmatpush.msra.mxu0 0.0
    %1388 = vmatpush.msra.mxu0 0.0
    %1389 = vmatpush.msra.mxu0 0.0
    %1390 = vmatpush.msra.mxu0 0.0
    %1391 = vmatpush.msra.mxu0 %v1375
    %1392 = vmatpush.msra.mxu0 %v1373
    %1393 = vmatmul.f32.gmra.mxu0 %v242
    %v1394 = vpop.f32.mrf.mxu0
    %v1395 = vadd.f32 0.0, %v1394
    %1396 = vdwg.mxu0
    %1397 = vmatpush.msra.mxu0 0.0
    %1398 = vmatpush.msra.mxu0 0.0
    %1399 = vmatpush.msra.mxu0 0.0
    %1400 = vmatpush.msra.mxu0 0.0
    %1401 = vmatpush.msra.mxu0 0.0
    %1402 = vmatpush.msra.mxu0 0.0
    %1403 = vmatpush.msra.mxu0 0.0
    %1404 = vmatpush.msra.mxu0 0.0
    %1405 = vmatpush.msra.mxu0 0.0
    %1406 = vmatpush.msra.mxu0 0.0
    %1407 = vmatpush.msra.mxu0 0.0
    %1408 = vmatpush.msra.mxu0 0.0
    %1409 = vmatpush.msra.mxu0 0.0
    %1410 = vmatpush.msra.mxu0 0.0
    %1411 = vmatpush.msra.mxu0 %v1376
    %1412 = vmatpush.msra.mxu0 %v1374
    %1413 = vmatmul.f32.gmra.mxu0 %v242
    %v1414 = vpop.f32.mrf.mxu0
    %v1415 = vadd.f32 0.0, %v1414
    %1416 = vdwg.mxu0
    %v1418 = vsel %vm219, %v1368, 0
    %1420 = vmatpush.msra.mxu0 0.0
    %1421 = vmatpush.msra.mxu0 0.0
    %1422 = vmatpush.msra.mxu0 0.0
    %1423 = vmatpush.msra.mxu0 0.0
    %1424 = vmatpush.msra.mxu0 0.0
    %1425 = vmatpush.msra.mxu0 0.0
    %1426 = vmatpush.msra.mxu0 0.0
    %1427 = vmatpush.msra.mxu0 0.0
    %1428 = vmatpush.msra.mxu0 0.0
    %1429 = vmatpush.msra.mxu0 0.0
    %1430 = vmatpush.msra.mxu0 0.0
    %1431 = vmatpush.msra.mxu0 0.0
    %1432 = vmatpush.msra.mxu0 0.0
    %1433 = vmatpush.msra.mxu0 0.0
    %1434 = vmatpush.msra.mxu0 %v1371
    %1435 = vmatpush.msra.mxu0 %v1369
    %1436 = vmatmul.f32.gmra.mxu0 %v1418
    %v1437 = vpop.f32.mrf.mxu0
    %v1438 = vadd.f32 %v1395, %v1437
    %1439 = vdwg.mxu0
    %1440 = vmatpush.msra.mxu0 0.0
    %1441 = vmatpush.msra.mxu0 0.0
    %1442 = vmatpush.msra.mxu0 0.0
    %1443 = vmatpush.msra.mxu0 0.0
    %1444 = vmatpush.msra.mxu0 0.0
    %1445 = vmatpush.msra.mxu0 0.0
    %1446 = vmatpush.msra.mxu0 0.0
    %1447 = vmatpush.msra.mxu0 0.0
    %1448 = vmatpush.msra.mxu0 0.0
    %1449 = vmatpush.msra.mxu0 0.0
    %1450 = vmatpush.msra.mxu0 0.0
    %1451 = vmatpush.msra.mxu0 0.0
    %1452 = vmatpush.msra.mxu0 0.0
    %1453 = vmatpush.msra.mxu0 0.0
    %1454 = vmatpush.msra.mxu0 %v1372
    %1455 = vmatpush.msra.mxu0 %v1370
    %1456 = vmatmul.f32.gmra.mxu0 %v1418
    %v1457 = vpop.f32.mrf.mxu0
    %v1458 = vadd.f32 %v1415, %v1457
    %1459 = vdwg.mxu0
    %v1460 = vld [vmem:[%s11 + $0x40] sm:$0xff]
    %v1461 = vld [vmem:[%s11 + $0x48] sm:$0xff]
    %v1462 = vld [vmem:[%s11 + $0x50] sm:$0xff]
    %v1463 = vld [vmem:[%s11 + $0x58] sm:$0xff]
    %1464 = vmatpush.msra.mxu0 0.0
    %1465 = vmatpush.msra.mxu0 0.0
    %1466 = vmatpush.msra.mxu0 0.0
    %1467 = vmatpush.msra.mxu0 0.0
    %1468 = vmatpush.msra.mxu0 0.0
    %1469 = vmatpush.msra.mxu0 0.0
    %1470 = vmatpush.msra.mxu0 0.0
    %1471 = vmatpush.msra.mxu0 0.0
    %1472 = vmatpush.msra.mxu0 0.0
    %1473 = vmatpush.msra.mxu0 0.0
    %1474 = vmatpush.msra.mxu0 0.0
    %1475 = vmatpush.msra.mxu0 0.0
    %1476 = vmatpush.msra.mxu0 0.0
    %1477 = vmatpush.msra.mxu0 0.0
    %1478 = vmatpush.msra.mxu0 %v1462
    %1479 = vmatpush.msra.mxu0 %v1460
    %1480 = vmatmul.f32.gmra.mxu0 %v220
    %v1481 = vpop.f32.mrf.mxu0
    %v1482 = vadd.f32 0.0, %v1481
    %1483 = vdwg.mxu0
    %1484 = vmatpush.msra.mxu0 0.0
    %1485 = vmatpush.msra.mxu0 0.0
    %1486 = vmatpush.msra.mxu0 0.0
    %1487 = vmatpush.msra.mxu0 0.0
    %1488 = vmatpush.msra.mxu0 0.0
    %1489 = vmatpush.msra.mxu0 0.0
    %1490 = vmatpush.msra.mxu0 0.0
    %1491 = vmatpush.msra.mxu0 0.0
    %1492 = vmatpush.msra.mxu0 0.0
    %1493 = vmatpush.msra.mxu0 0.0
    %1494 = vmatpush.msra.mxu0 0.0
    %1495 = vmatpush.msra.mxu0 0.0
    %1496 = vmatpush.msra.mxu0 0.0
    %1497 = vmatpush.msra.mxu0 0.0
    %1498 = vmatpush.msra.mxu0 %v1463
    %1499 = vmatpush.msra.mxu0 %v1461
    %1500 = vmatmul.f32.gmra.mxu0 %v220
    %v1501 = vpop.f32.mrf.mxu0
    %v1502 = vadd.f32 0.0, %v1501
    %1503 = vdwg.mxu0
    %v1504 = vadd.f32 %v1438, %v1482
    %v1505 = vadd.f32 %v1458, %v1502
    %v1506 = vld [vmem:[%s11 + $0x60] sm:$0xff]
    %v1507 = vld [vmem:[%s11 + $0x68] sm:$0xff]
    %v1508 = vld [vmem:[%s11 + $0x70] sm:$0xff]
    %v1509 = vld [vmem:[%s11 + $0x78] sm:$0xff]
    %v1518 = vsel %vm1044, %v1269, %v1262
    %v1519 = vsel %vm1046, %v1276, %v1518
    %v1520 = vsel %vm1048, %v1283, %v1519
    %v1521 = vsel %vm1050, %v1290, %v1520
    %v1522 = vsel %vm1052, %v1297, %v1521
    %v1523 = vsel %vm1054, %v1304, %v1522
    %v1524 = vsel %vm1056, %v1311, %v1523
    %v1525 = vsel %vm219, %v1524, 0
    %1527 = vmatpush.msra.mxu0 0.0
    %1528 = vmatpush.msra.mxu0 0.0
    %1529 = vmatpush.msra.mxu0 0.0
    %1530 = vmatpush.msra.mxu0 0.0
    %1531 = vmatpush.msra.mxu0 0.0
    %1532 = vmatpush.msra.mxu0 0.0
    %1533 = vmatpush.msra.mxu0 0.0
    %1534 = vmatpush.msra.mxu0 0.0
    %1535 = vmatpush.msra.mxu0 0.0
    %1536 = vmatpush.msra.mxu0 0.0
    %1537 = vmatpush.msra.mxu0 0.0
    %1538 = vmatpush.msra.mxu0 0.0
    %1539 = vmatpush.msra.mxu0 0.0
    %1540 = vmatpush.msra.mxu0 0.0
    %1541 = vmatpush.msra.mxu0 %v1508
    %1542 = vmatpush.msra.mxu0 %v1506
    %1543 = vmatmul.f32.gmra.mxu0 %v1525
    %v1544 = vpop.f32.mrf.mxu0
    %v1545 = vadd.f32 0.0, %v1544
    %1546 = vdwg.mxu0
    %1547 = vmatpush.msra.mxu0 0.0
    %1548 = vmatpush.msra.mxu0 0.0
    %1549 = vmatpush.msra.mxu0 0.0
    %1550 = vmatpush.msra.mxu0 0.0
    %1551 = vmatpush.msra.mxu0 0.0
    %1552 = vmatpush.msra.mxu0 0.0
    %1553 = vmatpush.msra.mxu0 0.0
    %1554 = vmatpush.msra.mxu0 0.0
    %1555 = vmatpush.msra.mxu0 0.0
    %1556 = vmatpush.msra.mxu0 0.0
    %1557 = vmatpush.msra.mxu0 0.0
    %1558 = vmatpush.msra.mxu0 0.0
    %1559 = vmatpush.msra.mxu0 0.0
    %1560 = vmatpush.msra.mxu0 0.0
    %1561 = vmatpush.msra.mxu0 %v1509
    %1562 = vmatpush.msra.mxu0 %v1507
    %1563 = vmatmul.f32.gmra.mxu0 %v1525
    %v1564 = vpop.f32.mrf.mxu0
    %v1565 = vadd.f32 0.0, %v1564
    %1566 = vdwg.mxu0
    %v1567 = vadd.f32 %v1504, %v1545
    %v1568 = vadd.f32 %v1505, %v1565
    %v1569 = vld [vmem:[%s11 + $0x80] sm:$0xff]
    %v1570 = vld [vmem:[%s11 + $0x88] sm:$0xff]
    %v1571 = vld [vmem:[%s11 + $0x90] sm:$0xff]
    %v1572 = vld [vmem:[%s11 + $0x98] sm:$0xff]
    %v1581 = vsel %vm1044, %v1325, %v1318
    %v1582 = vsel %vm1046, %v1332, %v1581
    %v1583 = vsel %vm1048, %v1339, %v1582
    %v1584 = vsel %vm1050, %v1346, %v1583
    %v1585 = vsel %vm1052, %v1353, %v1584
    %v1586 = vsel %vm1054, %v1360, %v1585
    %v1587 = vsel %vm1056, %v1367, %v1586
    %v1588 = vsel %vm219, %v1587, 0
    %1590 = vmatpush.msra.mxu0 0.0
    %1591 = vmatpush.msra.mxu0 0.0
    %1592 = vmatpush.msra.mxu0 0.0
    %1593 = vmatpush.msra.mxu0 0.0
    %1594 = vmatpush.msra.mxu0 0.0
    %1595 = vmatpush.msra.mxu0 0.0
    %1596 = vmatpush.msra.mxu0 0.0
    %1597 = vmatpush.msra.mxu0 0.0
    %1598 = vmatpush.msra.mxu0 0.0
    %1599 = vmatpush.msra.mxu0 0.0
    %1600 = vmatpush.msra.mxu0 0.0
    %1601 = vmatpush.msra.mxu0 0.0
    %1602 = vmatpush.msra.mxu0 0.0
    %1603 = vmatpush.msra.mxu0 0.0
    %1604 = vmatpush.msra.mxu0 %v1571
    %1605 = vmatpush.msra.mxu0 %v1569
    %1606 = vmatmul.f32.gmra.mxu0 %v1588
    %v1607 = vpop.f32.mrf.mxu0
    %v1608 = vadd.f32 0.0, %v1607
    %1609 = vdwg.mxu0
    %1610 = vmatpush.msra.mxu0 0.0
    %1611 = vmatpush.msra.mxu0 0.0
    %1612 = vmatpush.msra.mxu0 0.0
    %1613 = vmatpush.msra.mxu0 0.0
    %1614 = vmatpush.msra.mxu0 0.0
    %1615 = vmatpush.msra.mxu0 0.0
    %1616 = vmatpush.msra.mxu0 0.0
    %1617 = vmatpush.msra.mxu0 0.0
    %1618 = vmatpush.msra.mxu0 0.0
    %1619 = vmatpush.msra.mxu0 0.0
    %1620 = vmatpush.msra.mxu0 0.0
    %1621 = vmatpush.msra.mxu0 0.0
    %1622 = vmatpush.msra.mxu0 0.0
    %1623 = vmatpush.msra.mxu0 0.0
    %1624 = vmatpush.msra.mxu0 %v1572
    %1625 = vmatpush.msra.mxu0 %v1570
    %1626 = vmatmul.f32.gmra.mxu0 %v1588
    %v1627 = vpop.f32.mrf.mxu0
    %v1628 = vadd.f32 0.0, %v1627
    %1629 = vdwg.mxu0
    %v1630 = vadd.f32 %v1567, %v1608
    %v1631 = vadd.f32 %v1568, %v1628
    %v1640 = vmul.f32 %v1262, %v124
    %v1641 = vmul.f32 %v1269, %v152
    %v1642 = vmul.f32 %v1276, %v153
    %v1643 = vmul.f32 %v1283, %v154
    %v1644 = vmul.f32 %v1290, %v155
    %v1645 = vmul.f32 %v1297, %v156
    %v1646 = vmul.f32 %v1304, %v157
    %v1647 = vmul.f32 %v1311, %v158
    %v1648 = vld [vmem:[%s11 + $0xa0] sm:$0xff]
    %v1649 = vld [vmem:[%s11 + $0xa8] sm:$0xff]
    %v1650 = vld [vmem:[%s11 + $0xb0] sm:$0xff]
    %v1651 = vld [vmem:[%s11 + $0xb8] sm:$0xff]
    %v1660 = vrot.slane %v1641, 7
    %v1661 = vsel %vm1044, %v1660, %v1640
    %v1662 = vrot.slane %v1642, 6
    %v1663 = vsel %vm1046, %v1662, %v1661
    %v1664 = vrot.slane %v1643, 5
    %v1665 = vsel %vm1048, %v1664, %v1663
    %v1666 = vrot.slane %v1644, 4
    %v1667 = vsel %vm1050, %v1666, %v1665
    %v1668 = vrot.slane %v1645, 3
    %v1669 = vsel %vm1052, %v1668, %v1667
    %v1670 = vrot.slane %v1646, 2
    %v1671 = vsel %vm1054, %v1670, %v1669
    %v1672 = vrot.slane %v1647, 1
    %v1673 = vsel %vm1056, %v1672, %v1671
    %v1674 = vsel %vm219, %v1673, 0
    %1676 = vmatpush.msra.mxu0 0.0
    %1677 = vmatpush.msra.mxu0 0.0
    %1678 = vmatpush.msra.mxu0 0.0
    %1679 = vmatpush.msra.mxu0 0.0
    %1680 = vmatpush.msra.mxu0 0.0
    %1681 = vmatpush.msra.mxu0 0.0
    %1682 = vmatpush.msra.mxu0 0.0
    %1683 = vmatpush.msra.mxu0 0.0
    %1684 = vmatpush.msra.mxu0 0.0
    %1685 = vmatpush.msra.mxu0 0.0
    %1686 = vmatpush.msra.mxu0 0.0
    %1687 = vmatpush.msra.mxu0 0.0
    %1688 = vmatpush.msra.mxu0 0.0
    %1689 = vmatpush.msra.mxu0 0.0
    %1690 = vmatpush.msra.mxu0 %v1650
    %1691 = vmatpush.msra.mxu0 %v1648
    %1692 = vmatmul.f32.gmra.mxu0 %v1674
    %v1693 = vpop.f32.mrf.mxu0
    %v1694 = vadd.f32 0.0, %v1693
    %1695 = vdwg.mxu0
    %1696 = vmatpush.msra.mxu0 0.0
    %1697 = vmatpush.msra.mxu0 0.0
    %1698 = vmatpush.msra.mxu0 0.0
    %1699 = vmatpush.msra.mxu0 0.0
    %1700 = vmatpush.msra.mxu0 0.0
    %1701 = vmatpush.msra.mxu0 0.0
    %1702 = vmatpush.msra.mxu0 0.0
    %1703 = vmatpush.msra.mxu0 0.0
    %1704 = vmatpush.msra.mxu0 0.0
    %1705 = vmatpush.msra.mxu0 0.0
    %1706 = vmatpush.msra.mxu0 0.0
    %1707 = vmatpush.msra.mxu0 0.0
    %1708 = vmatpush.msra.mxu0 0.0
    %1709 = vmatpush.msra.mxu0 0.0
    %1710 = vmatpush.msra.mxu0 %v1651
    %1711 = vmatpush.msra.mxu0 %v1649
    %1712 = vmatmul.f32.gmra.mxu0 %v1674
    %v1713 = vpop.f32.mrf.mxu0
    %v1714 = vadd.f32 0.0, %v1713
    %1715 = vdwg.mxu0
    %v1716 = vadd.f32 %v1630, %v1694
    %v1717 = vadd.f32 %v1631, %v1714
    %v1726 = vmul.f32 %v1318, %v125
    %v1727 = vmul.f32 %v1325, %v184
    %v1728 = vmul.f32 %v1332, %v185
    %v1729 = vmul.f32 %v1339, %v186
    %v1730 = vmul.f32 %v1346, %v187
    %v1731 = vmul.f32 %v1353, %v188
    %v1732 = vmul.f32 %v1360, %v189
    %v1733 = vmul.f32 %v1367, %v190
    %v1734 = vld [vmem:[%s11 + $0xc0] sm:$0xff]
    %v1735 = vld [vmem:[%s11 + $0xc8] sm:$0xff]
    %v1736 = vld [vmem:[%s11 + $0xd0] sm:$0xff]
    %v1737 = vld [vmem:[%s11 + $0xd8] sm:$0xff]
    %v1746 = vrot.slane %v1727, 7
    %v1747 = vsel %vm1044, %v1746, %v1726
    %v1748 = vrot.slane %v1728, 6
    %v1749 = vsel %vm1046, %v1748, %v1747
    %v1750 = vrot.slane %v1729, 5
    %v1751 = vsel %vm1048, %v1750, %v1749
    %v1752 = vrot.slane %v1730, 4
    %v1753 = vsel %vm1050, %v1752, %v1751
    %v1754 = vrot.slane %v1731, 3
    %v1755 = vsel %vm1052, %v1754, %v1753
    %v1756 = vrot.slane %v1732, 2
    %v1757 = vsel %vm1054, %v1756, %v1755
    %v1758 = vrot.slane %v1733, 1
    %v1759 = vsel %vm1056, %v1758, %v1757
    %v1760 = vsel %vm219, %v1759, 0
    %1762 = vmatpush.msra.mxu0 0.0
    %1763 = vmatpush.msra.mxu0 0.0
    %1764 = vmatpush.msra.mxu0 0.0
    %1765 = vmatpush.msra.mxu0 0.0
    %1766 = vmatpush.msra.mxu0 0.0
    %1767 = vmatpush.msra.mxu0 0.0
    %1768 = vmatpush.msra.mxu0 0.0
    %1769 = vmatpush.msra.mxu0 0.0
    %1770 = vmatpush.msra.mxu0 0.0
    %1771 = vmatpush.msra.mxu0 0.0
    %1772 = vmatpush.msra.mxu0 0.0
    %1773 = vmatpush.msra.mxu0 0.0
    %1774 = vmatpush.msra.mxu0 0.0
    %1775 = vmatpush.msra.mxu0 0.0
    %1776 = vmatpush.msra.mxu0 %v1736
    %1777 = vmatpush.msra.mxu0 %v1734
    %1778 = vmatmul.f32.gmra.mxu0 %v1760
    %v1779 = vpop.f32.mrf.mxu0
    %v1780 = vadd.f32 0.0, %v1779
    %1781 = vdwg.mxu0
    %1782 = vmatpush.msra.mxu0 0.0
    %1783 = vmatpush.msra.mxu0 0.0
    %1784 = vmatpush.msra.mxu0 0.0
    %1785 = vmatpush.msra.mxu0 0.0
    %1786 = vmatpush.msra.mxu0 0.0
    %1787 = vmatpush.msra.mxu0 0.0
    %1788 = vmatpush.msra.mxu0 0.0
    %1789 = vmatpush.msra.mxu0 0.0
    %1790 = vmatpush.msra.mxu0 0.0
    %1791 = vmatpush.msra.mxu0 0.0
    %1792 = vmatpush.msra.mxu0 0.0
    %1793 = vmatpush.msra.mxu0 0.0
    %1794 = vmatpush.msra.mxu0 0.0
    %1795 = vmatpush.msra.mxu0 0.0
    %1796 = vmatpush.msra.mxu0 %v1737
    %1797 = vmatpush.msra.mxu0 %v1735
    %1798 = vmatmul.f32.gmra.mxu0 %v1760
    %v1799 = vpop.f32.mrf.mxu0
    %v1800 = vadd.f32 0.0, %v1799
    %1801 = vdwg.mxu0
    %v1802 = vadd.f32 %v1716, %v1780
    %v1803 = vadd.f32 %v1717, %v1800
    %v1804 = vld [vmem:[%s11 + $0xe0] sm:$0xff]
    %v1805 = vld [vmem:[%s11 + $0xe8] sm:$0xff]
    %v1806 = vld [vmem:[%s11 + $0xf0] sm:$0xff]
    %v1807 = vld [vmem:[%s11 + $0xf8] sm:$0xff]
    %v1816 = vsel %vm1044, %v1149, %v1142
    %v1817 = vsel %vm1046, %v1156, %v1816
    %v1818 = vsel %vm1048, %v1163, %v1817
    %v1819 = vsel %vm1050, %v1170, %v1818
    %v1820 = vsel %vm1052, %v1177, %v1819
    %v1821 = vsel %vm1054, %v1184, %v1820
    %v1822 = vsel %vm1056, %v1191, %v1821
    %v1823 = vsel %vm219, %v1822, 0
    %1825 = vmatpush.msra.mxu0 0.0
    %1826 = vmatpush.msra.mxu0 0.0
    %1827 = vmatpush.msra.mxu0 0.0
    %1828 = vmatpush.msra.mxu0 0.0
    %1829 = vmatpush.msra.mxu0 0.0
    %1830 = vmatpush.msra.mxu0 0.0
    %1831 = vmatpush.msra.mxu0 0.0
    %1832 = vmatpush.msra.mxu0 0.0
    %1833 = vmatpush.msra.mxu0 0.0
    %1834 = vmatpush.msra.mxu0 0.0
    %1835 = vmatpush.msra.mxu0 0.0
    %1836 = vmatpush.msra.mxu0 0.0
    %1837 = vmatpush.msra.mxu0 0.0
    %1838 = vmatpush.msra.mxu0 0.0
    %1839 = vmatpush.msra.mxu0 %v1806
    %1840 = vmatpush.msra.mxu0 %v1804
    %1841 = vmatmul.f32.gmra.mxu0 %v1823
    %v1842 = vpop.f32.mrf.mxu0
    %v1843 = vadd.f32 0.0, %v1842
    %1844 = vdwg.mxu0
    %1845 = vmatpush.msra.mxu0 0.0
    %1846 = vmatpush.msra.mxu0 0.0
    %1847 = vmatpush.msra.mxu0 0.0
    %1848 = vmatpush.msra.mxu0 0.0
    %1849 = vmatpush.msra.mxu0 0.0
    %1850 = vmatpush.msra.mxu0 0.0
    %1851 = vmatpush.msra.mxu0 0.0
    %1852 = vmatpush.msra.mxu0 0.0
    %1853 = vmatpush.msra.mxu0 0.0
    %1854 = vmatpush.msra.mxu0 0.0
    %1855 = vmatpush.msra.mxu0 0.0
    %1856 = vmatpush.msra.mxu0 0.0
    %1857 = vmatpush.msra.mxu0 0.0
    %1858 = vmatpush.msra.mxu0 0.0
    %1859 = vmatpush.msra.mxu0 %v1807
    %1860 = vmatpush.msra.mxu0 %v1805
    %1861 = vmatmul.f32.gmra.mxu0 %v1823
    %v1862 = vpop.f32.mrf.mxu0
    %v1863 = vadd.f32 0.0, %v1862
    %1864 = vdwg.mxu0
    %v1865 = vadd.f32 %v1802, %v1843
    %v1866 = vadd.f32 %v1803, %v1863
    %v1867 = vld [vmem:[%s11 + $0x100] sm:$0xff]
    %v1868 = vld [vmem:[%s11 + $0x108] sm:$0xff]
    %v1869 = vld [vmem:[%s11 + $0x110] sm:$0xff]
    %v1870 = vld [vmem:[%s11 + $0x118] sm:$0xff]
    %v1879 = vsel %vm1044, %v1213, %v1206
    %v1880 = vsel %vm1046, %v1220, %v1879
    %v1881 = vsel %vm1048, %v1227, %v1880
    %v1882 = vsel %vm1050, %v1234, %v1881
    %v1883 = vsel %vm1052, %v1241, %v1882
    %v1884 = vsel %vm1054, %v1248, %v1883
    %v1885 = vsel %vm1056, %v1255, %v1884
    %v1886 = vsel %vm219, %v1885, 0
    %1888 = vmatpush.msra.mxu0 0.0
    %1889 = vmatpush.msra.mxu0 0.0
    %1890 = vmatpush.msra.mxu0 0.0
    %1891 = vmatpush.msra.mxu0 0.0
    %1892 = vmatpush.msra.mxu0 0.0
    %1893 = vmatpush.msra.mxu0 0.0
    %1894 = vmatpush.msra.mxu0 0.0
    %1895 = vmatpush.msra.mxu0 0.0
    %1896 = vmatpush.msra.mxu0 0.0
    %1897 = vmatpush.msra.mxu0 0.0
    %1898 = vmatpush.msra.mxu0 0.0
    %1899 = vmatpush.msra.mxu0 0.0
    %1900 = vmatpush.msra.mxu0 0.0
    %1901 = vmatpush.msra.mxu0 0.0
    %1902 = vmatpush.msra.mxu0 %v1869
    %1903 = vmatpush.msra.mxu0 %v1867
    %1904 = vmatmul.f32.gmra.mxu0 %v1886
    %v1905 = vpop.f32.mrf.mxu0
    %v1906 = vadd.f32 0.0, %v1905
    %1907 = vdwg.mxu0
    %1908 = vmatpush.msra.mxu0 0.0
    %1909 = vmatpush.msra.mxu0 0.0
    %1910 = vmatpush.msra.mxu0 0.0
    %1911 = vmatpush.msra.mxu0 0.0
    %1912 = vmatpush.msra.mxu0 0.0
    %1913 = vmatpush.msra.mxu0 0.0
    %1914 = vmatpush.msra.mxu0 0.0
    %1915 = vmatpush.msra.mxu0 0.0
    %1916 = vmatpush.msra.mxu0 0.0
    %1917 = vmatpush.msra.mxu0 0.0
    %1918 = vmatpush.msra.mxu0 0.0
    %1919 = vmatpush.msra.mxu0 0.0
    %1920 = vmatpush.msra.mxu0 0.0
    %1921 = vmatpush.msra.mxu0 0.0
    %1922 = vmatpush.msra.mxu0 %v1870
    %1923 = vmatpush.msra.mxu0 %v1868
    %1924 = vmatmul.f32.gmra.mxu0 %v1886
    %v1925 = vpop.f32.mrf.mxu0
    %v1926 = vadd.f32 0.0, %v1925
    %1927 = vdwg.mxu0
    %v1928 = vadd.f32 %v1865, %v1906
    %v1929 = vadd.f32 %v1866, %v1926
    %v1931 = vperm.slane %v146, 0
    %v1932 = vperm.slane %v146, 1
    %v1935 = vadd.f32 %v1928, %v1931
    %v1936 = vadd.f32 %v1929, %v1932
    %vm1937 = vcmp.ge.f32.partialorder %v1935, 0.0
    %vm1938 = vcmp.ge.f32.partialorder %v1936, 0.0
    %v1940 = vperm.slane %v149, 0
    %v1941 = vperm.slane %v149, 1
    %v1944 = vmul.f32 %v1940, %v1935
    %v1945 = vmul.f32 %v1941, %v1936
    %v1946 = vsel %vm1937, %v1935, %v1944
    %v1947 = vsel %vm1938, %v1936, %v1945
    %v1948 = vld [vmem:[%s12] sm:$0xff]
    %v1949 = vld [vmem:[%s12 + $0x8] sm:$0xff]
    %v1950 = vld [vmem:[%s12 + $0x10] sm:$0xff]
    %v1951 = vld [vmem:[%s12 + $0x18] sm:$0xff]
    %v1952 = vld [vmem:[%s12 + $0x20] sm:$0xff]
    %v1953 = vld [vmem:[%s12 + $0x28] sm:$0xff]
    %v1954 = vld [vmem:[%s12 + $0x30] sm:$0xff]
    %v1955 = vld [vmem:[%s12 + $0x38] sm:$0xff]
    %v1956 = vld [vmem:[%s12 + $0x40] sm:$0xff]
    %v1957 = vld [vmem:[%s12 + $0x48] sm:$0xff]
    %v1958 = vld [vmem:[%s12 + $0x50] sm:$0xff]
    %v1959 = vld [vmem:[%s12 + $0x58] sm:$0xff]
    %v1960 = vld [vmem:[%s12 + $0x60] sm:$0xff]
    %v1961 = vld [vmem:[%s12 + $0x68] sm:$0xff]
    %v1962 = vld [vmem:[%s12 + $0x70] sm:$0xff]
    %v1963 = vld [vmem:[%s12 + $0x78] sm:$0xff]
    %v1964 = vld [vmem:[%s12 + $0x80] sm:$0xff]
    %v1965 = vld [vmem:[%s12 + $0x88] sm:$0xff]
    %v1966 = vld [vmem:[%s12 + $0x90] sm:$0xff]
    %v1967 = vld [vmem:[%s12 + $0x98] sm:$0xff]
    %v1968 = vld [vmem:[%s12 + $0xa0] sm:$0xff]
    %v1969 = vld [vmem:[%s12 + $0xa8] sm:$0xff]
    %v1970 = vld [vmem:[%s12 + $0xb0] sm:$0xff]
    %v1971 = vld [vmem:[%s12 + $0xb8] sm:$0xff]
    %v1972 = vld [vmem:[%s12 + $0xc0] sm:$0xff]
    %v1974 = vperm.slane %v147, 0
    %vm1976 = vcmask 588800
    %v1978 = vsel %vm1976, %v1947, 0
    %1980 = vmatpush.msra.mxu0 %v1963
    %1981 = vmatpush.msra.mxu0 %v1962
    %1982 = vmatpush.msra.mxu0 %v1961
    %1983 = vmatpush.msra.mxu0 %v1960
    %1984 = vmatpush.msra.mxu0 %v1959
    %1985 = vmatpush.msra.mxu0 %v1958
    %1986 = vmatpush.msra.mxu0 %v1957
    %1987 = vmatpush.msra.mxu0 %v1956
    %1988 = vmatpush.msra.mxu0 %v1955
    %1989 = vmatpush.msra.mxu0 %v1954
    %1990 = vmatpush.msra.mxu0 %v1953
    %1991 = vmatpush.msra.mxu0 %v1952
    %1992 = vmatpush.msra.mxu0 %v1951
    %1993 = vmatpush.msra.mxu0 %v1950
    %1994 = vmatpush.msra.mxu0 %v1949
    %1995 = vmatpush.msra.mxu0 %v1948
    %1996 = vmatmul.f32.gmra.mxu0 %v1946
    %v1997 = vpop.f32.mrf.mxu0
    %v1998 = vadd.f32 %v1974, %v1997
    %1999 = vdwg.mxu0
    %2000 = vmatpush.msra.mxu0 0.0
    %2001 = vmatpush.msra.mxu0 0.0
    %2002 = vmatpush.msra.mxu0 0.0
    %2003 = vmatpush.msra.mxu0 0.0
    %2004 = vmatpush.msra.mxu0 0.0
    %2005 = vmatpush.msra.mxu0 0.0
    %2006 = vmatpush.msra.mxu0 0.0
    %2007 = vmatpush.msra.mxu0 %v1972
    %2008 = vmatpush.msra.mxu0 %v1971
    %2009 = vmatpush.msra.mxu0 %v1970
    %2010 = vmatpush.msra.mxu0 %v1969
    %2011 = vmatpush.msra.mxu0 %v1968
    %2012 = vmatpush.msra.mxu0 %v1967
    %2013 = vmatpush.msra.mxu0 %v1966
    %2014 = vmatpush.msra.mxu0 %v1965
    %2015 = vmatpush.msra.mxu0 %v1964
    %2016 = vmatmul.f32.gmra.mxu0 %v1978
    %v2017 = vpop.f32.mrf.mxu0
    %v2018 = vadd.f32 %v1998, %v2017
    %2019 = vdwg.mxu0
    %vm2020 = vcmp.ge.f32.partialorder %v2018, 0.0
    %v2022 = vperm.slane %v150, 0
    %v2024 = vmul.f32 %v2022, %v2018
    %v2025 = vsel %vm2020, %v2018, %v2024
    %v2026 = vld [vmem:[%s13] sm:$0xff]
    %v2027 = vld [vmem:[%s13 + $0x8] sm:$0xff]
    %v2028 = vld [vmem:[%s13 + $0x10] sm:$0xff]
    %v2029 = vld [vmem:[%s13 + $0x18] sm:$0xff]
    %v2030 = vld [vmem:[%s13 + $0x20] sm:$0xff]
    %v2031 = vld [vmem:[%s13 + $0x28] sm:$0xff]
    %v2032 = vld [vmem:[%s13 + $0x30] sm:$0xff]
    %v2033 = vld [vmem:[%s13 + $0x38] sm:$0xff]
    %v2034 = vld [vmem:[%s13 + $0x40] sm:$0xff]
    %v2035 = vld [vmem:[%s13 + $0x48] sm:$0xff]
    %v2037 = vperm.slane %v148, 0
    %v2040 = vsel %vm756, %v2025, 0
    %2042 = vmatpush.msra.mxu0 0.0
    %2043 = vmatpush.msra.mxu0 0.0
    %2044 = vmatpush.msra.mxu0 0.0
    %2045 = vmatpush.msra.mxu0 0.0
    %2046 = vmatpush.msra.mxu0 0.0
    %2047 = vmatpush.msra.mxu0 0.0
    %2048 = vmatpush.msra.mxu0 %v2035
    %2049 = vmatpush.msra.mxu0 %v2034
    %2050 = vmatpush.msra.mxu0 %v2033
    %2051 = vmatpush.msra.mxu0 %v2032
    %2052 = vmatpush.msra.mxu0 %v2031
    %2053 = vmatpush.msra.mxu0 %v2030
    %2054 = vmatpush.msra.mxu0 %v2029
    %2055 = vmatpush.msra.mxu0 %v2028
    %2056 = vmatpush.msra.mxu0 %v2027
    %2057 = vmatpush.msra.mxu0 %v2026
    %2058 = vmatmul.f32.gmra.mxu0 %v2040
    %v2059 = vpop.f32.mrf.mxu0
    %v2060 = vadd.f32 %v2037, %v2059
    %2061 = vdwg.mxu0
    %vm2062 = vcmask 15360
    %2063 = vst.msk [vmem:[%s15] sm:$0xff] %vm2062, %v2060
    // Predicated region
    $region82: #{tpu_custom_call.1} parent=1 // pred_check
      _
    $region83: #{tpu_custom_call.1} parent=1 // pred_check_branch
      %2065 = sbr.rel (0) target = $region85
    $region84: #{tpu_custom_call.1} parent=1 // pred_region
      _
    $region85: #{tpu_custom_call.1} parent=1 // pred_fallthru
      _
    // Predicated region
    $region86: #{tpu_custom_call.1} parent=1 // pred_check
      _
    $region87: #{tpu_custom_call.1} parent=1 // pred_check_branch
      %2067 = sbr.rel (0) target = $region89
    $region88: #{tpu_custom_call.1} parent=1 // pred_region
      _
    $region89: #{tpu_custom_call.1} parent=1 // pred_fallthru
      _
    %2068 = vsyncpa [#allocation3], 1
    %2069 = vsyncpa [#allocation5], 1
    %2070 = vsyncpa [#allocation8], 1

</llo_original>
